<compile_context>
chip_gen: v6e
topology: v6e:2x2x1
jax: 0.10.0
libtpu: 0.0.40
codegen_flags: <defaults>
</compile_context>

<pallas_src>
import numpy as np
import jax
import jax.numpy as jnp
from jax.experimental import pallas as pl
from jax.experimental.pallas import tpu as pltpu

NUM_LAYERS = 4
KSIZE = 5
PAD = KSIZE // 2


def fcn_kernel(x_ref, w0_ref, wmid_ref, b_ref, wft_ref, bf_ref, o_ref):
    """One sequence per grid step, channels-first (C, L) throughout.

    x_ref:    (1, Cin, L)              f32   input block (one batch element)
    w0_ref:   (C, K*Cin)               bf16  im2col-packed first conv weight
    wmid_ref: (NUM_LAYERS-1, C, K*C)   bf16  im2col-packed middle conv weights
    b_ref:    (NUM_LAYERS, C, 1)       f32   conv biases
    wft_ref:  (Cout_final, C)          bf16  final 1x1 conv weight
    bf_ref:   (Cout_final, 1)          f32   final bias
    o_ref:    (1, Cout_final, L)       f32   output block (lane-dense along L)
    """
    L = x_ref.shape[-1]
    cin = x_ref.shape[-2]
    c_hidden = w0_ref.shape[0]
    n_mid = wmid_ref.shape[0]

    # ---- boundary masks: hoisted, pre-broadcast once per layer width -------
    # Tap k reads position l + (k - PAD); valid only while it stays in [0, L).
    # Built as one 0/1 f32 block matching the stacked im2col layout so each
    # layer needs exactly one elementwise multiply.
    lane = jax.lax.broadcasted_iota(jnp.int32, (1, L), 1)

    def tap_mask_block(rows):
        blocks = []
        for k in range(KSIZE):
            s = k - PAD
            valid = ((lane + s) >= 0) & ((lane + s) < L)
            blocks.append(jnp.broadcast_to(valid.astype(jnp.float32), (rows, L)))
        return jnp.concatenate(blocks, axis=0)            # (KSIZE*rows, L)

    mask0 = tap_mask_block(cin)
    maskh = tap_mask_block(c_hidden)

    def im2col(h, mask_block):
        # h: (C, L) f32 -> (K*C, L): K lane-shifted taps stacked along the
        # sublane (channel) axis; the mask zeroes wrap-around / out-of-range
        # positions.  Roll amounts are small compile-time constants.
        cols = []
        for k in range(KSIZE):
            s = k - PAD
            if s == 0:
                cols.append(h)
            else:
                cols.append(pltpu.roll(h, shift=(-s) % L, axis=1))
        return jnp.concatenate(cols, axis=0) * mask_block

    h = x_ref[0].astype(jnp.float32)                       # (Cin, L)

    # Layer 0: (C, K*Cin) @ (K*Cin, L) — bf16 MXU operands, f32 accumulation.
    col = im2col(h, mask0).astype(jnp.bfloat16)
    h = jnp.dot(w0_ref[...], col, preferred_element_type=jnp.float32)
    h = jnp.maximum(h + b_ref[0], 0.0)                     # f32 bias + ReLU

    # Layers 1 .. NUM_LAYERS-1: (C, K*C) @ (K*C, L)
    for i in range(n_mid):
        col = im2col(h, maskh).astype(jnp.bfloat16)
        h = jnp.dot(wmid_ref[i], col, preferred_element_type=jnp.float32)
        h = jnp.maximum(h + b_ref[i + 1], 0.0)

    # Final 1x1 conv, no ReLU: (Cout_final, C) @ (C, L) -> lane-dense output.
    out = jnp.dot(wft_ref[...], h.astype(jnp.bfloat16),
                  preferred_element_type=jnp.float32)
    o_ref[0] = (out + bf_ref[...]).astype(o_ref.dtype)


def regression_fcn_forward(x_ncl, w0, w_mid, b_all, wf_t, bf):
    """x_ncl: (B, Cin, L) f32 -> (B, Cout_final, L) f32 (NCL in / NCL out)."""
    B, Cin, L = x_ncl.shape
    Cout_final = wf_t.shape[0]

    return pl.pallas_call(
        fcn_kernel,
        out_shape=jax.ShapeDtypeStruct((B, Cout_final, L), x_ncl.dtype),
        grid=(B,),
        in_specs=[
            pl.BlockSpec((1, Cin, L), lambda b: (b, 0, 0)),
            # Grid-invariant weights/biases: constant index_map -> no re-DMA.
            pl.BlockSpec(w0.shape, lambda b: (0, 0)),
            pl.BlockSpec(w_mid.shape, lambda b: (0, 0, 0)),
            pl.BlockSpec(b_all.shape, lambda b: (0, 0, 0)),
            pl.BlockSpec(wf_t.shape, lambda b: (0, 0)),
            pl.BlockSpec(bf.shape, lambda b: (0, 0)),
        ],
        out_specs=pl.BlockSpec((1, Cout_final, L), lambda b: (b, 0, 0)),
        compiler_params=pltpu.CompilerParams(
            dimension_semantics=("parallel",),
            vmem_limit_bytes=32 * 1024 * 1024,
        ),
        # TODO(synk): if the x-tile DMA is still exposed at scaled shapes, set
        # pipeline_mode=pl.Buffered(3) on the x spec (drop to 2 on v7x).
    )(x_ncl, w0, w_mid, b_all, wf_t, bf)


def reference_forward(x_ncl, torch_ws, torch_bs):
    """Pure-JAX f32 reference with PyTorch (NCL / OIK) conventions."""
    h = x_ncl
    n = len(torch_ws)
    for i, (w, b) in enumerate(zip(torch_ws, torch_bs)):
        pad = (w.shape[-1] - 1) // 2
        h = jax.lax.conv_general_dilated(
            h, w, window_strides=(1,), padding=[(pad, pad)],
            dimension_numbers=("NCH", "OIH", "NCH"))
        h = h + b[None, :, None]
        if i < n - 1:
            h = jnp.maximum(h, 0.0)
    return h


if __name__ == "__main__":
    B, Cin, L, C = 2, 4, 16, 32
    key = jax.random.PRNGKey(0)
    keys = jax.random.split(key, 2 * (NUM_LAYERS + 1) + 1)
    x = jax.random.normal(keys[0], (B, Cin, L), jnp.float32)

    # Deterministic synthetic parameters in PyTorch Conv1d layout (Cout, Cin, K).
    torch_ws, torch_bs = [], []
    cin, ki = Cin, 1
    for _ in range(NUM_LAYERS):
        torch_ws.append(0.1 * jax.random.normal(keys[ki], (C, cin, KSIZE), jnp.float32)); ki += 1
        torch_bs.append(0.1 * jax.random.normal(keys[ki], (C,), jnp.float32)); ki += 1
        cin = C
    torch_ws.append(0.1 * jax.random.normal(keys[ki], (Cin, C, 1), jnp.float32)); ki += 1
    torch_bs.append(0.1 * jax.random.normal(keys[ki], (Cin,), jnp.float32)); ki += 1

    # Host-side repack (channels-first im2col):
    #   conv weight (Cout, Cin, K) -> (Cout, K, Cin) -> (Cout, K*Cin)
    #   so that column k*Cin + ci matches im2col row k*Cin + ci in the kernel.
    # Weights are pre-cast to bf16 for the MXU; biases stay f32.
    def pack_conv(w):
        return jnp.transpose(w, (0, 2, 1)).reshape(w.shape[0], -1)

    w0 = pack_conv(torch_ws[0]).astype(jnp.bfloat16)                      # (C, K*Cin)
    w_mid = jnp.stack([pack_conv(w) for w in torch_ws[1:NUM_LAYERS]]
                      ).astype(jnp.bfloat16)                              # (3, C, K*C)
    b_all = jnp.stack([b[:, None] for b in torch_bs[:NUM_LAYERS]])        # (4, C, 1)
    wf_t = torch_ws[-1][:, :, 0].astype(jnp.bfloat16)                     # (Cout_final, C)
    bf = torch_bs[-1][:, None]                                            # (Cout_final, 1)

    y = regression_fcn_forward(x, w0, w_mid, b_all, wf_t, bf)
    y = jax.block_until_ready(y)

    y_ref = reference_forward(x, torch_ws, torch_bs)
    # Tolerance loosened because the MXU operands are bf16 (f32 accumulation).
    np.testing.assert_allclose(np.asarray(y), np.asarray(y_ref), rtol=2e-2, atol=2e-2)
    print("KERNEL_OK")
</pallas_src>

<mosaic_0001>
module attributes {stable_mosaic.version = 11 : i64} {
  func.func @fcn_kernel(%arg0: i32, %arg1: memref<1x4x16xf32, #tpu.memory_space<vmem>>, %arg2: memref<32x20xbf16, #tpu.memory_space<vmem>>, %arg3: memref<3x32x160xbf16, #tpu.memory_space<vmem>>, %arg4: memref<4x32x1xf32, #tpu.memory_space<vmem>>, %arg5: memref<4x32xbf16, #tpu.memory_space<vmem>>, %arg6: memref<4x1xf32, #tpu.memory_space<vmem>>, %arg7: memref<1x4x16xf32, #tpu.memory_space<vmem>>) attributes {dimension_semantics = [#tpu.dimension_semantics<parallel>], iteration_bounds = array<i64: 2>, scalar_prefetch = 0 : i64, scratch_operands = 0 : i64, tpu.core_type = #tpu.core_type<tc>, window_params = [{transform_indices = @transform_0, window_bounds = array<i64: 1, 4, 16>}, {pipeline_mode = #tpu.pipeline_mode<synchronous>, transform_indices = @transform_1, window_bounds = array<i64: 32, 20>}, {pipeline_mode = #tpu.pipeline_mode<synchronous>, transform_indices = @transform_2, window_bounds = array<i64: 3, 32, 160>}, {pipeline_mode = #tpu.pipeline_mode<synchronous>, transform_indices = @transform_3, window_bounds = array<i64: 4, 32, 1>}, {pipeline_mode = #tpu.pipeline_mode<synchronous>, transform_indices = @transform_4, window_bounds = array<i64: 4, 32>}, {pipeline_mode = #tpu.pipeline_mode<synchronous>, transform_indices = @transform_5, window_bounds = array<i64: 4, 1>}, {transform_indices = @transform_6, window_bounds = array<i64: 1, 4, 16>}]} {
    %0 = tpu.iota {dimensions = array<i32: 1>} : vector<1x16xi32>
    %c-2_i32 = arith.constant -2 : i32
    %1 = vector.broadcast %c-2_i32 : i32 to vector<1x16xi32>
    %2 = arith.addi %0, %1 : vector<1x16xi32>
    %c0_i32 = arith.constant 0 : i32
    %3 = vector.broadcast %c0_i32 : i32 to vector<1x16xi32>
    %4 = arith.cmpi sge, %2, %3 : vector<1x16xi32>
    %c-2_i32_0 = arith.constant -2 : i32
    %5 = vector.broadcast %c-2_i32_0 : i32 to vector<1x16xi32>
    %6 = arith.addi %0, %5 : vector<1x16xi32>
    %c16_i32 = arith.constant 16 : i32
    %7 = vector.broadcast %c16_i32 : i32 to vector<1x16xi32>
    %8 = arith.cmpi slt, %6, %7 : vector<1x16xi32>
    %9 = arith.andi %4, %8 : vector<1x16xi1>
    %10 = arith.extui %9 : vector<1x16xi1> to vector<1x16xi32>
    %11 = arith.sitofp %10 : vector<1x16xi32> to vector<1x16xf32>
    %12 = vector.shape_cast %11 : vector<1x16xf32> to vector<1x16xf32>
    %13 = vector.broadcast %12 : vector<1x16xf32> to vector<4x16xf32>
    %c-1_i32 = arith.constant -1 : i32
    %14 = vector.broadcast %c-1_i32 : i32 to vector<1x16xi32>
    %15 = arith.addi %0, %14 : vector<1x16xi32>
    %c0_i32_1 = arith.constant 0 : i32
    %16 = vector.broadcast %c0_i32_1 : i32 to vector<1x16xi32>
    %17 = arith.cmpi sge, %15, %16 : vector<1x16xi32>
    %c-1_i32_2 = arith.constant -1 : i32
    %18 = vector.broadcast %c-1_i32_2 : i32 to vector<1x16xi32>
    %19 = arith.addi %0, %18 : vector<1x16xi32>
    %c16_i32_3 = arith.constant 16 : i32
    %20 = vector.broadcast %c16_i32_3 : i32 to vector<1x16xi32>
    %21 = arith.cmpi slt, %19, %20 : vector<1x16xi32>
    %22 = arith.andi %17, %21 : vector<1x16xi1>
    %23 = arith.extui %22 : vector<1x16xi1> to vector<1x16xi32>
    %24 = arith.sitofp %23 : vector<1x16xi32> to vector<1x16xf32>
    %25 = vector.shape_cast %24 : vector<1x16xf32> to vector<1x16xf32>
    %26 = vector.broadcast %25 : vector<1x16xf32> to vector<4x16xf32>
    %c0_i32_4 = arith.constant 0 : i32
    %27 = vector.broadcast %c0_i32_4 : i32 to vector<1x16xi32>
    %28 = arith.addi %0, %27 : vector<1x16xi32>
    %c0_i32_5 = arith.constant 0 : i32
    %29 = vector.broadcast %c0_i32_5 : i32 to vector<1x16xi32>
    %30 = arith.cmpi sge, %28, %29 : vector<1x16xi32>
    %c0_i32_6 = arith.constant 0 : i32
    %31 = vector.broadcast %c0_i32_6 : i32 to vector<1x16xi32>
    %32 = arith.addi %0, %31 : vector<1x16xi32>
    %c16_i32_7 = arith.constant 16 : i32
    %33 = vector.broadcast %c16_i32_7 : i32 to vector<1x16xi32>
    %34 = arith.cmpi slt, %32, %33 : vector<1x16xi32>
    %35 = arith.andi %30, %34 : vector<1x16xi1>
    %36 = arith.extui %35 : vector<1x16xi1> to vector<1x16xi32>
    %37 = arith.sitofp %36 : vector<1x16xi32> to vector<1x16xf32>
    %38 = vector.shape_cast %37 : vector<1x16xf32> to vector<1x16xf32>
    %39 = vector.broadcast %38 : vector<1x16xf32> to vector<4x16xf32>
    %c1_i32 = arith.constant 1 : i32
    %40 = vector.broadcast %c1_i32 : i32 to vector<1x16xi32>
    %41 = arith.addi %0, %40 : vector<1x16xi32>
    %c0_i32_8 = arith.constant 0 : i32
    %42 = vector.broadcast %c0_i32_8 : i32 to vector<1x16xi32>
    %43 = arith.cmpi sge, %41, %42 : vector<1x16xi32>
    %c1_i32_9 = arith.constant 1 : i32
    %44 = vector.broadcast %c1_i32_9 : i32 to vector<1x16xi32>
    %45 = arith.addi %0, %44 : vector<1x16xi32>
    %c16_i32_10 = arith.constant 16 : i32
    %46 = vector.broadcast %c16_i32_10 : i32 to vector<1x16xi32>
    %47 = arith.cmpi slt, %45, %46 : vector<1x16xi32>
    %48 = arith.andi %43, %47 : vector<1x16xi1>
    %49 = arith.extui %48 : vector<1x16xi1> to vector<1x16xi32>
    %50 = arith.sitofp %49 : vector<1x16xi32> to vector<1x16xf32>
    %51 = vector.shape_cast %50 : vector<1x16xf32> to vector<1x16xf32>
    %52 = vector.broadcast %51 : vector<1x16xf32> to vector<4x16xf32>
    %c2_i32 = arith.constant 2 : i32
    %53 = vector.broadcast %c2_i32 : i32 to vector<1x16xi32>
    %54 = arith.addi %0, %53 : vector<1x16xi32>
    %c0_i32_11 = arith.constant 0 : i32
    %55 = vector.broadcast %c0_i32_11 : i32 to vector<1x16xi32>
    %56 = arith.cmpi sge, %54, %55 : vector<1x16xi32>
    %c2_i32_12 = arith.constant 2 : i32
    %57 = vector.broadcast %c2_i32_12 : i32 to vector<1x16xi32>
    %58 = arith.addi %0, %57 : vector<1x16xi32>
    %c16_i32_13 = arith.constant 16 : i32
    %59 = vector.broadcast %c16_i32_13 : i32 to vector<1x16xi32>
    %60 = arith.cmpi slt, %58, %59 : vector<1x16xi32>
    %61 = arith.andi %56, %60 : vector<1x16xi1>
    %62 = arith.extui %61 : vector<1x16xi1> to vector<1x16xi32>
    %63 = arith.sitofp %62 : vector<1x16xi32> to vector<1x16xf32>
    %64 = vector.shape_cast %63 : vector<1x16xf32> to vector<1x16xf32>
    %65 = vector.broadcast %64 : vector<1x16xf32> to vector<4x16xf32>
    %66 = tpu.concatenate %13, %26, %39, %52, %65 in 0 : vector<4x16xf32>, vector<4x16xf32>, vector<4x16xf32>, vector<4x16xf32>, vector<4x16xf32> -> vector<20x16xf32>
    %c-2_i32_14 = arith.constant -2 : i32
    %67 = vector.broadcast %c-2_i32_14 : i32 to vector<1x16xi32>
    %68 = arith.addi %0, %67 : vector<1x16xi32>
    %c0_i32_15 = arith.constant 0 : i32
    %69 = vector.broadcast %c0_i32_15 : i32 to vector<1x16xi32>
    %70 = arith.cmpi sge, %68, %69 : vector<1x16xi32>
    %c-2_i32_16 = arith.constant -2 : i32
    %71 = vector.broadcast %c-2_i32_16 : i32 to vector<1x16xi32>
    %72 = arith.addi %0, %71 : vector<1x16xi32>
    %c16_i32_17 = arith.constant 16 : i32
    %73 = vector.broadcast %c16_i32_17 : i32 to vector<1x16xi32>
    %74 = arith.cmpi slt, %72, %73 : vector<1x16xi32>
    %75 = arith.andi %70, %74 : vector<1x16xi1>
    %76 = arith.extui %75 : vector<1x16xi1> to vector<1x16xi32>
    %77 = arith.sitofp %76 : vector<1x16xi32> to vector<1x16xf32>
    %78 = vector.shape_cast %77 : vector<1x16xf32> to vector<1x16xf32>
    %79 = vector.broadcast %78 : vector<1x16xf32> to vector<32x16xf32>
    %c-1_i32_18 = arith.constant -1 : i32
    %80 = vector.broadcast %c-1_i32_18 : i32 to vector<1x16xi32>
    %81 = arith.addi %0, %80 : vector<1x16xi32>
    %c0_i32_19 = arith.constant 0 : i32
    %82 = vector.broadcast %c0_i32_19 : i32 to vector<1x16xi32>
    %83 = arith.cmpi sge, %81, %82 : vector<1x16xi32>
    %c-1_i32_20 = arith.constant -1 : i32
    %84 = vector.broadcast %c-1_i32_20 : i32 to vector<1x16xi32>
    %85 = arith.addi %0, %84 : vector<1x16xi32>
    %c16_i32_21 = arith.constant 16 : i32
    %86 = vector.broadcast %c16_i32_21 : i32 to vector<1x16xi32>
    %87 = arith.cmpi slt, %85, %86 : vector<1x16xi32>
    %88 = arith.andi %83, %87 : vector<1x16xi1>
    %89 = arith.extui %88 : vector<1x16xi1> to vector<1x16xi32>
    %90 = arith.sitofp %89 : vector<1x16xi32> to vector<1x16xf32>
    %91 = vector.shape_cast %90 : vector<1x16xf32> to vector<1x16xf32>
    %92 = vector.broadcast %91 : vector<1x16xf32> to vector<32x16xf32>
    %c0_i32_22 = arith.constant 0 : i32
    %93 = vector.broadcast %c0_i32_22 : i32 to vector<1x16xi32>
    %94 = arith.addi %0, %93 : vector<1x16xi32>
    %c0_i32_23 = arith.constant 0 : i32
    %95 = vector.broadcast %c0_i32_23 : i32 to vector<1x16xi32>
    %96 = arith.cmpi sge, %94, %95 : vector<1x16xi32>
    %c0_i32_24 = arith.constant 0 : i32
    %97 = vector.broadcast %c0_i32_24 : i32 to vector<1x16xi32>
    %98 = arith.addi %0, %97 : vector<1x16xi32>
    %c16_i32_25 = arith.constant 16 : i32
    %99 = vector.broadcast %c16_i32_25 : i32 to vector<1x16xi32>
    %100 = arith.cmpi slt, %98, %99 : vector<1x16xi32>
    %101 = arith.andi %96, %100 : vector<1x16xi1>
    %102 = arith.extui %101 : vector<1x16xi1> to vector<1x16xi32>
    %103 = arith.sitofp %102 : vector<1x16xi32> to vector<1x16xf32>
    %104 = vector.shape_cast %103 : vector<1x16xf32> to vector<1x16xf32>
    %105 = vector.broadcast %104 : vector<1x16xf32> to vector<32x16xf32>
    %c1_i32_26 = arith.constant 1 : i32
    %106 = vector.broadcast %c1_i32_26 : i32 to vector<1x16xi32>
    %107 = arith.addi %0, %106 : vector<1x16xi32>
    %c0_i32_27 = arith.constant 0 : i32
    %108 = vector.broadcast %c0_i32_27 : i32 to vector<1x16xi32>
    %109 = arith.cmpi sge, %107, %108 : vector<1x16xi32>
    %c1_i32_28 = arith.constant 1 : i32
    %110 = vector.broadcast %c1_i32_28 : i32 to vector<1x16xi32>
    %111 = arith.addi %0, %110 : vector<1x16xi32>
    %c16_i32_29 = arith.constant 16 : i32
    %112 = vector.broadcast %c16_i32_29 : i32 to vector<1x16xi32>
    %113 = arith.cmpi slt, %111, %112 : vector<1x16xi32>
    %114 = arith.andi %109, %113 : vector<1x16xi1>
    %115 = arith.extui %114 : vector<1x16xi1> to vector<1x16xi32>
    %116 = arith.sitofp %115 : vector<1x16xi32> to vector<1x16xf32>
    %117 = vector.shape_cast %116 : vector<1x16xf32> to vector<1x16xf32>
    %118 = vector.broadcast %117 : vector<1x16xf32> to vector<32x16xf32>
    %c2_i32_30 = arith.constant 2 : i32
    %119 = vector.broadcast %c2_i32_30 : i32 to vector<1x16xi32>
    %120 = arith.addi %0, %119 : vector<1x16xi32>
    %c0_i32_31 = arith.constant 0 : i32
    %121 = vector.broadcast %c0_i32_31 : i32 to vector<1x16xi32>
    %122 = arith.cmpi sge, %120, %121 : vector<1x16xi32>
    %c2_i32_32 = arith.constant 2 : i32
    %123 = vector.broadcast %c2_i32_32 : i32 to vector<1x16xi32>
    %124 = arith.addi %0, %123 : vector<1x16xi32>
    %c16_i32_33 = arith.constant 16 : i32
    %125 = vector.broadcast %c16_i32_33 : i32 to vector<1x16xi32>
    %126 = arith.cmpi slt, %124, %125 : vector<1x16xi32>
    %127 = arith.andi %122, %126 : vector<1x16xi1>
    %128 = arith.extui %127 : vector<1x16xi1> to vector<1x16xi32>
    %129 = arith.sitofp %128 : vector<1x16xi32> to vector<1x16xf32>
    %130 = vector.shape_cast %129 : vector<1x16xf32> to vector<1x16xf32>
    %131 = vector.broadcast %130 : vector<1x16xf32> to vector<32x16xf32>
    %132 = tpu.concatenate %79, %92, %105, %118, %131 in 0 : vector<32x16xf32>, vector<32x16xf32>, vector<32x16xf32>, vector<32x16xf32>, vector<32x16xf32> -> vector<160x16xf32>
    %c0 = arith.constant 0 : index
    %c0_34 = arith.constant 0 : index
    %c0_35 = arith.constant 0 : index
    %133 = vector.load %arg1[%c0, %c0_34, %c0_35] : memref<1x4x16xf32, #tpu.memory_space<vmem>>, vector<1x4x16xf32>
    %134 = vector.shape_cast %133 : vector<1x4x16xf32> to vector<4x16xf32>
    %c2_i32_36 = arith.constant 2 : i32
    %135 = tpu.dynamic_rotate %134 by %c2_i32_36 dim 1 : vector<4x16xf32>, i32 -> vector<4x16xf32>
    %c1_i32_37 = arith.constant 1 : i32
    %136 = tpu.dynamic_rotate %134 by %c1_i32_37 dim 1 : vector<4x16xf32>, i32 -> vector<4x16xf32>
    %c15_i32 = arith.constant 15 : i32
    %137 = tpu.dynamic_rotate %134 by %c15_i32 dim 1 : vector<4x16xf32>, i32 -> vector<4x16xf32>
    %c14_i32 = arith.constant 14 : i32
    %138 = tpu.dynamic_rotate %134 by %c14_i32 dim 1 : vector<4x16xf32>, i32 -> vector<4x16xf32>
    %139 = tpu.concatenate %135, %136, %134, %137, %138 in 0 : vector<4x16xf32>, vector<4x16xf32>, vector<4x16xf32>, vector<4x16xf32>, vector<4x16xf32> -> vector<20x16xf32>
    %140 = arith.mulf %139, %66 : vector<20x16xf32>
    %141 = arith.truncf %140 : vector<20x16xf32> to vector<20x16xbf16>
    %c0_38 = arith.constant 0 : index
    %c0_39 = arith.constant 0 : index
    %142 = vector.load %arg2[%c0_38, %c0_39] : memref<32x20xbf16, #tpu.memory_space<vmem>>, vector<32x20xbf16>
    %cst = arith.constant dense<0.000000e+00> : vector<32x16xf32>
    %143 = tpu.matmul %142, %141, %cst {dimension_numbers = #tpu.dot_dimension_numbers<[1], [0], [0], [1], [0, 0, 1, 1], [], []>} : vector<32x20xbf16>, vector<20x16xbf16>, vector<32x16xf32> -> vector<32x16xf32>
    %c0_40 = arith.constant 0 : index
    %c0_41 = arith.constant 0 : index
    %c0_42 = arith.constant 0 : index
    %144 = vector.load %arg4[%c0_40, %c0_41, %c0_42] : memref<4x32x1xf32, #tpu.memory_space<vmem>>, vector<1x32x1xf32>
    %145 = vector.shape_cast %144 : vector<1x32x1xf32> to vector<32x1xf32>
    %146 = vector.broadcast %145 : vector<32x1xf32> to vector<32x16xf32>
    %147 = arith.addf %143, %146 : vector<32x16xf32>
    %cst_43 = arith.constant 0.000000e+00 : f32
    %148 = vector.broadcast %cst_43 : f32 to vector<32x16xf32>
    %149 = arith.maximumf %147, %148 : vector<32x16xf32>
    %c2_i32_44 = arith.constant 2 : i32
    %150 = tpu.dynamic_rotate %149 by %c2_i32_44 dim 1 : vector<32x16xf32>, i32 -> vector<32x16xf32>
    %c1_i32_45 = arith.constant 1 : i32
    %151 = tpu.dynamic_rotate %149 by %c1_i32_45 dim 1 : vector<32x16xf32>, i32 -> vector<32x16xf32>
    %c15_i32_46 = arith.constant 15 : i32
    %152 = tpu.dynamic_rotate %149 by %c15_i32_46 dim 1 : vector<32x16xf32>, i32 -> vector<32x16xf32>
    %c14_i32_47 = arith.constant 14 : i32
    %153 = tpu.dynamic_rotate %149 by %c14_i32_47 dim 1 : vector<32x16xf32>, i32 -> vector<32x16xf32>
    %154 = tpu.concatenate %150, %151, %149, %152, %153 in 0 : vector<32x16xf32>, vector<32x16xf32>, vector<32x16xf32>, vector<32x16xf32>, vector<32x16xf32> -> vector<160x16xf32>
    %155 = arith.mulf %154, %132 : vector<160x16xf32>
    %156 = arith.truncf %155 : vector<160x16xf32> to vector<160x16xbf16>
    %c0_48 = arith.constant 0 : index
    %c0_49 = arith.constant 0 : index
    %c0_50 = arith.constant 0 : index
    %157 = vector.load %arg3[%c0_48, %c0_49, %c0_50] : memref<3x32x160xbf16, #tpu.memory_space<vmem>>, vector<1x32x160xbf16>
    %158 = vector.shape_cast %157 : vector<1x32x160xbf16> to vector<32x160xbf16>
    %cst_51 = arith.constant dense<0.000000e+00> : vector<32x16xf32>
    %159 = tpu.matmul %158, %156, %cst_51 {dimension_numbers = #tpu.dot_dimension_numbers<[1], [0], [0], [1], [0, 0, 1, 1], [], []>} : vector<32x160xbf16>, vector<160x16xbf16>, vector<32x16xf32> -> vector<32x16xf32>
    %c1 = arith.constant 1 : index
    %c0_52 = arith.constant 0 : index
    %c0_53 = arith.constant 0 : index
    %160 = vector.load %arg4[%c1, %c0_52, %c0_53] : memref<4x32x1xf32, #tpu.memory_space<vmem>>, vector<1x32x1xf32>
    %161 = vector.shape_cast %160 : vector<1x32x1xf32> to vector<32x1xf32>
    %162 = vector.broadcast %161 : vector<32x1xf32> to vector<32x16xf32>
    %163 = arith.addf %159, %162 : vector<32x16xf32>
    %cst_54 = arith.constant 0.000000e+00 : f32
    %164 = vector.broadcast %cst_54 : f32 to vector<32x16xf32>
    %165 = arith.maximumf %163, %164 : vector<32x16xf32>
    %c2_i32_55 = arith.constant 2 : i32
    %166 = tpu.dynamic_rotate %165 by %c2_i32_55 dim 1 : vector<32x16xf32>, i32 -> vector<32x16xf32>
    %c1_i32_56 = arith.constant 1 : i32
    %167 = tpu.dynamic_rotate %165 by %c1_i32_56 dim 1 : vector<32x16xf32>, i32 -> vector<32x16xf32>
    %c15_i32_57 = arith.constant 15 : i32
    %168 = tpu.dynamic_rotate %165 by %c15_i32_57 dim 1 : vector<32x16xf32>, i32 -> vector<32x16xf32>
    %c14_i32_58 = arith.constant 14 : i32
    %169 = tpu.dynamic_rotate %165 by %c14_i32_58 dim 1 : vector<32x16xf32>, i32 -> vector<32x16xf32>
    %170 = tpu.concatenate %166, %167, %165, %168, %169 in 0 : vector<32x16xf32>, vector<32x16xf32>, vector<32x16xf32>, vector<32x16xf32>, vector<32x16xf32> -> vector<160x16xf32>
    %171 = arith.mulf %170, %132 : vector<160x16xf32>
    %172 = arith.truncf %171 : vector<160x16xf32> to vector<160x16xbf16>
    %c1_59 = arith.constant 1 : index
    %c0_60 = arith.constant 0 : index
    %c0_61 = arith.constant 0 : index
    %173 = vector.load %arg3[%c1_59, %c0_60, %c0_61] : memref<3x32x160xbf16, #tpu.memory_space<vmem>>, vector<1x32x160xbf16>
    %174 = vector.shape_cast %173 : vector<1x32x160xbf16> to vector<32x160xbf16>
    %cst_62 = arith.constant dense<0.000000e+00> : vector<32x16xf32>
    %175 = tpu.matmul %174, %172, %cst_62 {dimension_numbers = #tpu.dot_dimension_numbers<[1], [0], [0], [1], [0, 0, 1, 1], [], []>} : vector<32x160xbf16>, vector<160x16xbf16>, vector<32x16xf32> -> vector<32x16xf32>
    %c2 = arith.constant 2 : index
    %c0_63 = arith.constant 0 : index
    %c0_64 = arith.constant 0 : index
    %176 = vector.load %arg4[%c2, %c0_63, %c0_64] : memref<4x32x1xf32, #tpu.memory_space<vmem>>, vector<1x32x1xf32>
    %177 = vector.shape_cast %176 : vector<1x32x1xf32> to vector<32x1xf32>
    %178 = vector.broadcast %177 : vector<32x1xf32> to vector<32x16xf32>
    %179 = arith.addf %175, %178 : vector<32x16xf32>
    %cst_65 = arith.constant 0.000000e+00 : f32
    %180 = vector.broadcast %cst_65 : f32 to vector<32x16xf32>
    %181 = arith.maximumf %179, %180 : vector<32x16xf32>
    %c2_i32_66 = arith.constant 2 : i32
    %182 = tpu.dynamic_rotate %181 by %c2_i32_66 dim 1 : vector<32x16xf32>, i32 -> vector<32x16xf32>
    %c1_i32_67 = arith.constant 1 : i32
    %183 = tpu.dynamic_rotate %181 by %c1_i32_67 dim 1 : vector<32x16xf32>, i32 -> vector<32x16xf32>
    %c15_i32_68 = arith.constant 15 : i32
    %184 = tpu.dynamic_rotate %181 by %c15_i32_68 dim 1 : vector<32x16xf32>, i32 -> vector<32x16xf32>
    %c14_i32_69 = arith.constant 14 : i32
    %185 = tpu.dynamic_rotate %181 by %c14_i32_69 dim 1 : vector<32x16xf32>, i32 -> vector<32x16xf32>
    %186 = tpu.concatenate %182, %183, %181, %184, %185 in 0 : vector<32x16xf32>, vector<32x16xf32>, vector<32x16xf32>, vector<32x16xf32>, vector<32x16xf32> -> vector<160x16xf32>
    %187 = arith.mulf %186, %132 : vector<160x16xf32>
    %188 = arith.truncf %187 : vector<160x16xf32> to vector<160x16xbf16>
    %c2_70 = arith.constant 2 : index
    %c0_71 = arith.constant 0 : index
    %c0_72 = arith.constant 0 : index
    %189 = vector.load %arg3[%c2_70, %c0_71, %c0_72] : memref<3x32x160xbf16, #tpu.memory_space<vmem>>, vector<1x32x160xbf16>
    %190 = vector.shape_cast %189 : vector<1x32x160xbf16> to vector<32x160xbf16>
    %cst_73 = arith.constant dense<0.000000e+00> : vector<32x16xf32>
    %191 = tpu.matmul %190, %188, %cst_73 {dimension_numbers = #tpu.dot_dimension_numbers<[1], [0], [0], [1], [0, 0, 1, 1], [], []>} : vector<32x160xbf16>, vector<160x16xbf16>, vector<32x16xf32> -> vector<32x16xf32>
    %c3 = arith.constant 3 : index
    %c0_74 = arith.constant 0 : index
    %c0_75 = arith.constant 0 : index
    %192 = vector.load %arg4[%c3, %c0_74, %c0_75] : memref<4x32x1xf32, #tpu.memory_space<vmem>>, vector<1x32x1xf32>
    %193 = vector.shape_cast %192 : vector<1x32x1xf32> to vector<32x1xf32>
    %194 = vector.broadcast %193 : vector<32x1xf32> to vector<32x16xf32>
    %195 = arith.addf %191, %194 : vector<32x16xf32>
    %cst_76 = arith.constant 0.000000e+00 : f32
    %196 = vector.broadcast %cst_76 : f32 to vector<32x16xf32>
    %197 = arith.maximumf %195, %196 : vector<32x16xf32>
    %c0_77 = arith.constant 0 : index
    %c0_78 = arith.constant 0 : index
    %198 = vector.load %arg5[%c0_77, %c0_78] : memref<4x32xbf16, #tpu.memory_space<vmem>>, vector<4x32xbf16>
    %199 = arith.truncf %197 : vector<32x16xf32> to vector<32x16xbf16>
    %cst_79 = arith.constant dense<0.000000e+00> : vector<4x16xf32>
    %200 = tpu.matmul %198, %199, %cst_79 {dimension_numbers = #tpu.dot_dimension_numbers<[1], [0], [0], [1], [0, 0, 1, 1], [], []>} : vector<4x32xbf16>, vector<32x16xbf16>, vector<4x16xf32> -> vector<4x16xf32>
    %c0_80 = arith.constant 0 : index
    %c0_81 = arith.constant 0 : index
    %201 = vector.load %arg6[%c0_80, %c0_81] : memref<4x1xf32, #tpu.memory_space<vmem>>, vector<4x1xf32>
    %202 = vector.broadcast %201 : vector<4x1xf32> to vector<4x16xf32>
    %203 = arith.addf %200, %202 : vector<4x16xf32>
    %c0_82 = arith.constant 0 : index
    %c0_83 = arith.constant 0 : index
    %c0_84 = arith.constant 0 : index
    %204 = vector.load %arg7[%c0_82, %c0_83, %c0_84] : memref<1x4x16xf32, #tpu.memory_space<vmem>>, vector<1x4x16xf32>
    %205 = vector.shape_cast %204 : vector<1x4x16xf32> to vector<4x16xf32>
    %206 = vector.shape_cast %203 : vector<4x16xf32> to vector<1x4x16xf32>
    tpu.vector_store %arg7[%c0_82, %c0_83, %c0_84], %206 {strides = array<i32>} : memref<1x4x16xf32, #tpu.memory_space<vmem>>, vector<1x4x16xf32>,
    return
  }
  func.func @transform_0(%arg0: i32) -> (i32, i32, i32) {
    %c0_i32 = arith.constant 0 : i32
    %c0_i32_0 = arith.constant 0 : i32
    %c0_i32_1 = arith.constant 0 : i32
    return %arg0, %c0_i32, %c0_i32_0 : i32, i32, i32
  }
  func.func @transform_1(%arg0: i32) -> (i32, i32) {
    %c0_i32 = arith.constant 0 : i32
    %c0_i32_0 = arith.constant 0 : i32
    %c0_i32_1 = arith.constant 0 : i32
    return %c0_i32, %c0_i32_0 : i32, i32
  }
  func.func @transform_2(%arg0: i32) -> (i32, i32, i32) {
    %c0_i32 = arith.constant 0 : i32
    %c0_i32_0 = arith.constant 0 : i32
    %c0_i32_1 = arith.constant 0 : i32
    %c0_i32_2 = arith.constant 0 : i32
    return %c0_i32, %c0_i32_0, %c0_i32_1 : i32, i32, i32
  }
  func.func @transform_3(%arg0: i32) -> (i32, i32, i32) {
    %c0_i32 = arith.constant 0 : i32
    %c0_i32_0 = arith.constant 0 : i32
    %c0_i32_1 = arith.constant 0 : i32
    %c0_i32_2 = arith.constant 0 : i32
    return %c0_i32, %c0_i32_0, %c0_i32_1 : i32, i32, i32
  }
  func.func @transform_4(%arg0: i32) -> (i32, i32) {
    %c0_i32 = arith.constant 0 : i32
    %c0_i32_0 = arith.constant 0 : i32
    %c0_i32_1 = arith.constant 0 : i32
    return %c0_i32, %c0_i32_0 : i32, i32
  }
  func.func @transform_5(%arg0: i32) -> (i32, i32) {
    %c0_i32 = arith.constant 0 : i32
    %c0_i32_0 = arith.constant 0 : i32
    %c0_i32_1 = arith.constant 0 : i32
    return %c0_i32, %c0_i32_0 : i32, i32
  }
  func.func @transform_6(%arg0: i32) -> (i32, i32, i32) {
    %c0_i32 = arith.constant 0 : i32
    %c0_i32_0 = arith.constant 0 : i32
    %c0_i32_1 = arith.constant 0 : i32
    return %arg0, %c0_i32, %c0_i32_0 : i32, i32, i32
  }
}

</mosaic_0001>

<llo_original>
// kernel: tpu_custom_call.1
$region0: #{tpu_custom_call.1}
  #allocation0 [shape = 'u32[]', space=smem, size = 0x4, offset = 0x4, fixed_abs, tag = 'smem constant byte address 0x4 - core index']
  #allocation1 [shape = 'u32[144,128]{1,0:T(1,128)}', space=vmem, size = 0x12000, scoped, tag = 'internal scratch']
  %s0 = inlined_call_operand.vmem [shape: f32[2,4,16], index: 0, kind: input, shape index: {}]
  %s1 = inlined_call_operand.vmem [shape: bf16[32,20], index: 1, kind: input, shape index: {}]
  %s2 = inlined_call_operand.vmem [shape: bf16[3,32,160], index: 2, kind: input, shape index: {}]
  %s3 = inlined_call_operand.vmem [shape: f32[4,32,1], index: 3, kind: input, shape index: {}]
  %s4 = inlined_call_operand.vmem [shape: bf16[4,32], index: 4, kind: input, shape index: {}]
  %s5 = inlined_call_operand.vmem [shape: f32[4,1], index: 5, kind: input, shape index: {}]
  %s6 = inlined_call_operand.hbm [shape: f32[2,4,16], index: 6, kind: output, shape index: {}]
  %s7 = sld [smem:[#allocation0]]
  $region57: #{tpu_custom_call.1} parent=0
    _
  %s9 = ssub.s32 1, %s7
  %s10 = scalar_select 0, %s9, %s7
  $region1: #{tpu_custom_call.1} parent=0
    #allocation2 [shape = 'u8[4096]{0}', space=vmem, size = 0x1000, scoped, tag = 'output window, operand 0']
    #allocation3 [shape = 's32[2]{0}', space=sflag, size = 0x8, scoped, tag = 'scoped memory for tpu_custom_call.1']
    %11 = vsyncpa [#allocation3], 0
    %s12 = scalar_lea.sflag [#allocation3], 1
    %13 = vsyncpa %s12, 0
    loop: start=0, step=1, limit=4
    $region2: #{tpu_custom_call.1} parent=1 // loop_pre_header
      _
    $region3: #{tpu_custom_call.1} parent=1 // loop_header
      %s15 = sphi 0, %s19
      %p16 = scmp.ge.s32.totalorder %s15, 4
      %s25 = sphi 0, %s27
      %s28 = sphi 0, %s25
      %s29 = sphi 0, %s28
      %s45 = sphi 0, %s29
      %s49 = sphi 0, %s49
      %s51 = sphi 0, %s49
      %s52 = sphi 0, %s51
      %s66 = sphi 0, %s52
      %s70 = sphi 0, %s70
      %s72 = sphi 0, %s70
      %s73 = sphi 0, %s72
      %s87 = sphi 0, %s73
      %s91 = sphi 0, %s91
      %s93 = sphi 0, %s91
      %s94 = sphi 0, %s93
      %s108 = sphi 0, %s94
      %s112 = sphi 0, %s112
      %s114 = sphi 0, %s112
      %s115 = sphi 0, %s114
      %s129 = sphi 0, %s115
      %s133 = sphi 0, %s133
      %s135 = sphi 0, %s133
      %s136 = sphi 0, %s135
      %s150 = sphi 0, %s136
      %s156 = sphi 0, %s158
      %s159 = sphi 0, %s156
      %s160 = sphi 0, %s159
      %s176 = sphi 0, %s160
    $region4: #{tpu_custom_call.1} parent=1 // loop_header_branch
      %18 = sbr.rel (%p16) target = $region8
    $region5: #{tpu_custom_call.1} parent=1 // loop_body
      %s20 = ssub.s32 %s15, 1
      %s21 = ssub.s32 %s15, 2
      %s22 = sadd.s32 %s15, 1
      %s23 = ssub.s32 %s15, %s22
      %p24 = scmp.eq.s32.totalorder %s23, 0
      %s26 = sadd.s32 %s25, 1
      %s27 = scalar_select %p24, %s25, %s26
      %p30 = pneg %p24
      %p31 = scmp.eq.s32.totalorder %s15, 1
      %p32 = por %p30, %p31
      %p33 = scmp.ne.s32.totalorder %s25, %s28
      %p34 = scmp.eq.s32.totalorder %s15, 0
      %p35 = por %p33, %p34
      %p36 = scmp.ne.s32.totalorder %s25, %s28
      %p37 = scmp.eq.s32.totalorder %s20, 1
      %p38 = por %p36, %p37
      %p39 = scmp.ne.s32.totalorder %s28, %s29
      %p40 = scmp.eq.s32.totalorder %s20, 0
      %p41 = por %p39, %p40
      %p42 = scmp.ne.s32.totalorder %s28, %s29
      %p43 = scmp.eq.s32.totalorder %s21, 1
      %p44 = por %p42, %p43
      %p46 = scmp.ne.s32.totalorder %s29, %s45
      %p47 = scmp.eq.s32.totalorder %s21, 0
      %p48 = por %p46, %p47
      %s50 = sadd.s32 %s49, 1
      %p53 = scmp.eq.s32.totalorder %s15, 1
      %p54 = scmp.ne.s32.totalorder %s49, %s51
      %p55 = scmp.eq.s32.totalorder %s15, 0
      %p56 = por %p54, %p55
      %p57 = scmp.ne.s32.totalorder %s49, %s51
      %p58 = scmp.eq.s32.totalorder %s20, 1
      %p59 = por %p57, %p58
      %p60 = scmp.ne.s32.totalorder %s51, %s52
      %p61 = scmp.eq.s32.totalorder %s20, 0
      %p62 = por %p60, %p61
      %p63 = scmp.ne.s32.totalorder %s51, %s52
      %p64 = scmp.eq.s32.totalorder %s21, 1
      %p65 = por %p63, %p64
      %p67 = scmp.ne.s32.totalorder %s52, %s66
      %p68 = scmp.eq.s32.totalorder %s21, 0
      %p69 = por %p67, %p68
      %s71 = sadd.s32 %s70, 1
      %p74 = scmp.eq.s32.totalorder %s15, 1
      %p75 = scmp.ne.s32.totalorder %s70, %s72
      %p76 = scmp.eq.s32.totalorder %s15, 0
      %p77 = por %p75, %p76
      %p78 = scmp.ne.s32.totalorder %s70, %s72
      %p79 = scmp.eq.s32.totalorder %s20, 1
      %p80 = por %p78, %p79
      %p81 = scmp.ne.s32.totalorder %s72, %s73
      %p82 = scmp.eq.s32.totalorder %s20, 0
      %p83 = por %p81, %p82
      %p84 = scmp.ne.s32.totalorder %s72, %s73
      %p85 = scmp.eq.s32.totalorder %s21, 1
      %p86 = por %p84, %p85
      %p88 = scmp.ne.s32.totalorder %s73, %s87
      %p89 = scmp.eq.s32.totalorder %s21, 0
      %p90 = por %p88, %p89
      %s92 = sadd.s32 %s91, 1
      %p95 = scmp.eq.s32.totalorder %s15, 1
      %p96 = scmp.ne.s32.totalorder %s91, %s93
      %p97 = scmp.eq.s32.totalorder %s15, 0
      %p98 = por %p96, %p97
      %p99 = scmp.ne.s32.totalorder %s91, %s93
      %p100 = scmp.eq.s32.totalorder %s20, 1
      %p101 = por %p99, %p100
      %p102 = scmp.ne.s32.totalorder %s93, %s94
      %p103 = scmp.eq.s32.totalorder %s20, 0
      %p104 = por %p102, %p103
      %p105 = scmp.ne.s32.totalorder %s93, %s94
      %p106 = scmp.eq.s32.totalorder %s21, 1
      %p107 = por %p105, %p106
      %p109 = scmp.ne.s32.totalorder %s94, %s108
      %p110 = scmp.eq.s32.totalorder %s21, 0
      %p111 = por %p109, %p110
      %s113 = sadd.s32 %s112, 1
      %p116 = scmp.eq.s32.totalorder %s15, 1
      %p117 = scmp.ne.s32.totalorder %s112, %s114
      %p118 = scmp.eq.s32.totalorder %s15, 0
      %p119 = por %p117, %p118
      %p120 = scmp.ne.s32.totalorder %s112, %s114
      %p121 = scmp.eq.s32.totalorder %s20, 1
      %p122 = por %p120, %p121
      %p123 = scmp.ne.s32.totalorder %s114, %s115
      %p124 = scmp.eq.s32.totalorder %s20, 0
      %p125 = por %p123, %p124
      %p126 = scmp.ne.s32.totalorder %s114, %s115
      %p127 = scmp.eq.s32.totalorder %s21, 1
      %p128 = por %p126, %p127
      %p130 = scmp.ne.s32.totalorder %s115, %s129
      %p131 = scmp.eq.s32.totalorder %s21, 0
      %p132 = por %p130, %p131
      %s134 = sadd.s32 %s133, 1
      %p137 = scmp.eq.s32.totalorder %s15, 1
      %p138 = scmp.ne.s32.totalorder %s133, %s135
      %p139 = scmp.eq.s32.totalorder %s15, 0
      %p140 = por %p138, %p139
      %p141 = scmp.ne.s32.totalorder %s133, %s135
      %p142 = scmp.eq.s32.totalorder %s20, 1
      %p143 = por %p141, %p142
      %p144 = scmp.ne.s32.totalorder %s135, %s136
      %p145 = scmp.eq.s32.totalorder %s20, 0
      %p146 = por %p144, %p145
      %p147 = scmp.ne.s32.totalorder %s135, %s136
      %p148 = scmp.eq.s32.totalorder %s21, 1
      %p149 = por %p147, %p148
      %p151 = scmp.ne.s32.totalorder %s136, %s150
      %p152 = scmp.eq.s32.totalorder %s21, 0
      %p153 = por %p151, %p152
      %s154 = ssub.s32 %s15, %s22
      %p155 = scmp.eq.s32.totalorder %s154, 0
      %s157 = sadd.s32 %s156, 1
      %s158 = scalar_select %p155, %s156, %s157
      %p161 = pneg %p155
      %p162 = scmp.eq.s32.totalorder %s15, 1
      %p163 = por %p161, %p162
      %p164 = scmp.ne.s32.totalorder %s156, %s159
      %p165 = scmp.eq.s32.totalorder %s15, 0
      %p166 = por %p164, %p165
      %p167 = scmp.ne.s32.totalorder %s156, %s159
      %p168 = scmp.eq.s32.totalorder %s20, 1
      %p169 = por %p167, %p168
      %p170 = scmp.ne.s32.totalorder %s159, %s160
      %p171 = scmp.eq.s32.totalorder %s20, 0
      %p172 = por %p170, %p171
      %p173 = scmp.ne.s32.totalorder %s159, %s160
      %p174 = scmp.eq.s32.totalorder %s21, 1
      %p175 = por %p173, %p174
      %p177 = scmp.ne.s32.totalorder %s160, %s176
      %p178 = scmp.eq.s32.totalorder %s21, 0
      %p179 = por %p177, %p178
      %p180 = scmp.le.s32.totalorder 1, %s15
      %p181 = scmp.lt.s32.totalorder %s15, 3
      %p182 = pnand %p180, %p181
      %p183 = pneg %p182
      // Predicated region
      $region9: #{tpu_custom_call.1} parent=5 // pred_check
        _
      $region10: #{tpu_custom_call.1} parent=5 // pred_check_branch
        %185 = sbr.rel (%p182) target = $region12
      $region11: #{tpu_custom_call.1} parent=5 // pred_region
        %s186 = ssub.s32 %s15, 1
        // Predicated region
        $region13: #{tpu_custom_call.1} parent=11 // pred_check
          %p187 = pneg %p62
        $region14: #{tpu_custom_call.1} parent=11 // pred_check_branch
          %189 = sbr.rel (%p187) target = $region16
        $region15: #{tpu_custom_call.1} parent=11 // pred_region
          _
        $region16: #{tpu_custom_call.1} parent=11 // pred_fallthru
          _
        // Predicated region
        $region17: #{tpu_custom_call.1} parent=11 // pred_check
          %p190 = pneg %p83
        $region18: #{tpu_custom_call.1} parent=11 // pred_check_branch
          %192 = sbr.rel (%p190) target = $region20
        $region19: #{tpu_custom_call.1} parent=11 // pred_region
          _
        $region20: #{tpu_custom_call.1} parent=11 // pred_fallthru
          _
        // Predicated region
        $region21: #{tpu_custom_call.1} parent=11 // pred_check
          %p193 = pneg %p104
        $region22: #{tpu_custom_call.1} parent=11 // pred_check_branch
          %195 = sbr.rel (%p193) target = $region24
        $region23: #{tpu_custom_call.1} parent=11 // pred_region
          _
        $region24: #{tpu_custom_call.1} parent=11 // pred_fallthru
          _
        // Predicated region
        $region25: #{tpu_custom_call.1} parent=11 // pred_check
          %p196 = pneg %p125
        $region26: #{tpu_custom_call.1} parent=11 // pred_check_branch
          %198 = sbr.rel (%p196) target = $region28
        $region27: #{tpu_custom_call.1} parent=11 // pred_region
          _
        $region28: #{tpu_custom_call.1} parent=11 // pred_fallthru
          _
        // Predicated region
        $region29: #{tpu_custom_call.1} parent=11 // pred_check
          %p199 = pneg %p146
        $region30: #{tpu_custom_call.1} parent=11 // pred_check_branch
          %201 = sbr.rel (%p199) target = $region32
        $region31: #{tpu_custom_call.1} parent=11 // pred_region
          _
        $region32: #{tpu_custom_call.1} parent=11 // pred_fallthru
          _
      $region12: #{tpu_custom_call.1} parent=5 // pred_fallthru
        _
      %p202 = scmp.lt.s32.totalorder %s15, 2
      // Predicated region
      $region33: #{tpu_custom_call.1} parent=5 // pred_check
        %p203 = pneg %p202
      $region34: #{tpu_custom_call.1} parent=5 // pred_check_branch
        %205 = sbr.rel (%p203) target = $region36
      $region35: #{tpu_custom_call.1} parent=5 // pred_region
        // Predicated region
        $region37: #{tpu_custom_call.1} parent=35 // pred_check
          %p206 = pneg %p35
        $region38: #{tpu_custom_call.1} parent=35 // pred_check_branch
          %208 = sbr.rel (%p206) target = $region40
        $region39: #{tpu_custom_call.1} parent=35 // pred_region
          %p209 = scmp.lt.s32.totalorder %s15, 1
          %s210 = scalar_select %p209, %s15, 1
          %s211 = smul.addr %s210, 4
          %s212 = scalar_lea.vmem %s0, %s211
        $region40: #{tpu_custom_call.1} parent=35 // pred_fallthru
          _
      $region36: #{tpu_custom_call.1} parent=5 // pred_fallthru
        _
      %p213 = scmp.le.s32.totalorder 1, %s15
      %p214 = scmp.lt.s32.totalorder %s15, 3
      %p215 = pnand %p213, %p214
      %p216 = pneg %p215
      // Predicated region
      $region41: #{tpu_custom_call.1} parent=5 // pred_check
        _
      $region42: #{tpu_custom_call.1} parent=5 // pred_check_branch
        %218 = sbr.rel (%p215) target = $region44
      $region43: #{tpu_custom_call.1} parent=5 // pred_region
        %s219 = ssub.s32 %s15, 1
        %p220 = scmp.lt.s32.totalorder %s20, 1
        %s221 = scalar_select %p220, %s20, 1
        %s222 = smul.addr %s221, 4
        %s223 = scalar_lea.vmem %s0, %s222
        %p224 = pneg %p41
        %p225 = pneg %p38
        %p226 = pneg %p62
        %p227 = pneg %p59
        %p228 = pneg %p83
        %p229 = pneg %p80
        %p230 = pneg %p104
        %p231 = pneg %p101
        %p232 = pneg %p125
        %p233 = pneg %p122
        %p234 = pneg %p146
        %p235 = pneg %p143
        %p236 = pneg %p172
        %p237 = pneg %p169
        %s238 = sand.u32 %s159, 1
        %s239 = scalar_lea.sflag [#allocation3], %s238
        %s240 = sand.u32 %s159, 1
        %s241 = smul.addr %s240, 4
        %s242 = scalar_lea.vmem [#allocation2], %s241
        %p243 = scmp.lt.s32.totalorder %s20, 1
        %s244 = scalar_select %p243, %s20, 1
        %s245 = smul.addr %s244, 4
        %s246 = scalar_lea.vmem %s0, %s245
        %v248 = vlaneseq
        %v249 = vand.u32 %v248, 127
        %v250 = vadd.s32 %v249, 4294967294
        %vm251 = vcmp.ge.s32.totalorder %v250, 0
        %vm252 = vcmp.lt.s32.totalorder %v250, 16
        %vm253 = vmand %vm251, %vm252
        %v254 = vsel %vm253, 1, 0
        %v255 = vcvt.s32.f32 %v254
        %v256 = vadd.s32 %v249, 4294967295
        %vm257 = vcmp.ge.s32.totalorder %v256, 0
        %vm258 = vcmp.lt.s32.totalorder %v256, 16
        %vm259 = vmand %vm257, %vm258
        %v260 = vsel %vm259, 1, 0
        %v261 = vcvt.s32.f32 %v260
        %vm262 = vcmp.ge.s32.totalorder %v249, 0
        %vm263 = vcmp.lt.s32.totalorder %v249, 16
        %vm264 = vmand %vm262, %vm263
        %v265 = vsel %vm264, 1, 0
        %v266 = vcvt.s32.f32 %v265
        %v267 = vadd.s32 %v249, 1
        %vm268 = vcmp.ge.s32.totalorder %v267, 0
        %vm269 = vcmp.lt.s32.totalorder %v267, 16
        %vm270 = vmand %vm268, %vm269
        %v271 = vsel %vm270, 1, 0
        %v272 = vcvt.s32.f32 %v271
        %v273 = vadd.s32 %v249, 2
        %vm274 = vcmp.ge.s32.totalorder %v273, 0
        %vm275 = vcmp.lt.s32.totalorder %v273, 16
        %vm276 = vmand %vm274, %vm275
        %v277 = vsel %vm276, 1, 0
        %v278 = vcvt.s32.f32 %v277
        %vm279 = vcmask 1043456
        %v280 = vsel %vm279, %v255, %v261
        %v281 = vsel %vm279, %v266, %v272
        %v287 = vld [vmem:[%s246] sm:$0xf]
        %vm288 = vcmask 1047680
        %289 = vrot.lane.b32.xlu0 %v287, 16
        %v290 = vpop.permute.xlu0 %289
        %v291 = vsel %vm288, %v290, %v287
        %292 = vrot.lane.b32.xlu0 %v291, 16
        %v293 = vpop.permute.xlu0 %292
        %v294 = vsel %vm288, %v293, %v287
        %v296 = vrot.slane %v294, 4
        %297 = vrot.lane.b32.xlu0 %v296, 127
        %v298 = vpop.permute.xlu0 %297
        %301 = vrot.lane.b32.xlu0 %v287, 14
        %v302 = vpop.permute.xlu0 %301
        %304 = vrot.lane.b32.xlu0 %v296, 13
        %v305 = vpop.permute.xlu0 %304
        %307 = vrot.lane.b32.xlu0 %v294, 12
        %v308 = vpop.permute.xlu0 %307
        %v310 = vsel %vm279, %v294, %v298
        %v311 = vsel %vm279, %v302, %v305
        %314 = vrot.lane.b32.xlu0 %v280, 14
        %v315 = vpop.permute.xlu0 %314
        %316 = vrot.lane.b32.xlu0 %v281, 14
        %v317 = vpop.permute.xlu0 %316
        %318 = vrot.lane.b32.xlu0 %v278, 14
        %v319 = vpop.permute.xlu0 %318
        %v323 = vmul.f32 %v310, %v315
        %v324 = vmul.f32 %v311, %v317
        %v325 = vmul.f32 %v308, %v319
        %v326 = vpack.c.bf16 %v324, %v323
        %v327 = vpack.c.bf16 %v325, %v325
        %v328 = vld [vmem:[%s1] sm:$0xf]
        %v329 = vld [vmem:[%s1 + $0x4] sm:$0xf]
        %v330 = vld [vmem:[%s1 + $0x8] sm:$0xf]
        %v331 = vld [vmem:[%s1 + $0xc] sm:$0xf]
        %v332 = vld [vmem:[%s3] sm:$0xff]
        %v333 = vld [vmem:[%s3 + $0x8] sm:$0xff]
        %v334 = vld [vmem:[%s3 + $0x10] sm:$0xff]
        %v335 = vld [vmem:[%s3 + $0x18] sm:$0xff]
        %337 = vset.pattern.permute.xlu0 0
        %338 = vperm.xlu0 %337, %v332
        %v339 = vpop.permute.xlu0 %338
        %342 = vset.pattern.permute.xlu0 0
        %343 = vperm.xlu0 %342, %v333
        %v344 = vpop.permute.xlu0 %343
        %347 = vset.pattern.permute.xlu0 0
        %348 = vperm.xlu0 %347, %v334
        %v349 = vpop.permute.xlu0 %348
        %352 = vset.pattern.permute.xlu0 0
        %353 = vperm.xlu0 %352, %v335
        %v354 = vpop.permute.xlu0 %353
        %v360 = vunpack.c.l.b16 %v328
        %v361 = vunpack.c.l.b16 %v329
        %v362 = vunpack.c.l.b16 %v330
        %v363 = vunpack.c.l.b16 %v331
        %v364 = vpack.c.b16 %v361, %v360
        %v365 = vpack.c.b16 %v363, %v362
        %368 = vrot.lane.b32.xlu0 %v326, 114
        %v369 = vpop.permute.xlu0 %368
        %370 = vrot.lane.b32.xlu0 %v327, 114
        %v371 = vpop.permute.xlu0 %370
        %vm373 = vcmask 162816
        %v375 = vsel %vm373, %v364, 0
        %v378 = vsel %vm373, %v365, 0
        %vm380 = vcmask 1041408
        %v382 = vsel %vm380, %v371, 0
        %384 = vmatprep.subr.bf16.mxu0 0
        %385 = vmatpush1.bf16.msra.mxu0 0
        %386 = vmatprep.subr.bf16.mxu0 0
        %387 = vmatpush1.bf16.msra.mxu0 0
        %388 = vmatprep.subr.bf16.mxu0 0
        %389 = vmatpush1.bf16.msra.mxu0 0
        %390 = vmatprep.subr.bf16.mxu0 0
        %391 = vmatpush1.bf16.msra.mxu0 0
        %392 = vmatprep.subr.bf16.mxu0 0
        %393 = vmatpush1.bf16.msra.mxu0 0
        %394 = vmatprep.subr.bf16.mxu0 0
        %395 = vmatpush1.bf16.msra.mxu0 0
        %396 = vmatprep.subr.bf16.mxu0 0
        %397 = vmatpush1.bf16.msra.mxu0 %v382
        %398 = vmatprep.subr.bf16.mxu0 0
        %399 = vmatpush1.bf16.msra.mxu0 %v369
        %400 = vmatprep.subr.bf16.mxu0 0
        %401 = vmatpush2.bf16.msra.mxu0 0
        %402 = vmatprep.subr.bf16.mxu0 0
        %403 = vmatpush2.bf16.msra.mxu0 0
        %404 = vmatprep.subr.bf16.mxu0 0
        %405 = vmatpush2.bf16.msra.mxu0 0
        %406 = vmatprep.subr.bf16.mxu0 0
        %407 = vmatpush2.bf16.msra.mxu0 0
        %408 = vmatprep.subr.bf16.mxu0 0
        %409 = vmatpush2.bf16.msra.mxu0 0
        %410 = vmatprep.subr.bf16.mxu0 0
        %411 = vmatpush2.bf16.msra.mxu0 0
        %412 = vmatprep.subr.bf16.mxu0 0
        %413 = vmatpush2.bf16.msra.mxu0 0
        %414 = vmatprep.subr.bf16.mxu0 0
        %415 = vmatpush2.bf16.msra.mxu0 0
        %416 = vmatprep.mubr.bf16.mxu0 0
        %417 = vmatmul.mubr.bf16.gmra.mxu0 %v375
        %v418 = vpop.f32.mrf.mxu0
        %v419 = vadd.f32 %v339, %v418
        %v420 = vpop.f32.mrf.mxu0
        %v421 = vpop.f32.mrf.mxu0
        %v422 = vadd.f32 %v344, %v421
        %v423 = vpop.f32.mrf.mxu0
        %424 = vmatprep.mubr.bf16.mxu0 0
        %425 = vmatmul.mubr.bf16.gmra.mxu0 %v378
        %v426 = vpop.f32.mrf.mxu0
        %v427 = vadd.f32 %v349, %v426
        %v428 = vpop.f32.mrf.mxu0
        %v429 = vpop.f32.mrf.mxu0
        %v430 = vadd.f32 %v354, %v429
        %v431 = vpop.f32.mrf.mxu0
        %432 = vdwg.mxu0
        %v433 = vmax.f32 %v419, 0.0
        %v434 = vmax.f32 %v422, 0.0
        %v435 = vmax.f32 %v427, 0.0
        %v436 = vmax.f32 %v430, 0.0
        %437 = vrot.lane.b32.xlu0 %v433, 16
        %v438 = vpop.permute.xlu0 %437
        %v439 = vsel %vm288, %v438, %v433
        %440 = vrot.lane.b32.xlu0 %v434, 16
        %v441 = vpop.permute.xlu0 %440
        %v442 = vsel %vm288, %v441, %v434
        %443 = vrot.lane.b32.xlu0 %v435, 16
        %v444 = vpop.permute.xlu0 %443
        %v445 = vsel %vm288, %v444, %v435
        %446 = vrot.lane.b32.xlu0 %v436, 16
        %v447 = vpop.permute.xlu0 %446
        %v448 = vsel %vm288, %v447, %v436
        %449 = vrot.lane.b32.xlu0 %v439, 16
        %v450 = vpop.permute.xlu0 %449
        %451 = vrot.lane.b32.xlu0 %v442, 16
        %v452 = vpop.permute.xlu0 %451
        %453 = vrot.lane.b32.xlu0 %v445, 16
        %v454 = vpop.permute.xlu0 %453
        %455 = vrot.lane.b32.xlu0 %v448, 16
        %v456 = vpop.permute.xlu0 %455
        %v457 = vsel %vm288, %v450, %v433
        %v458 = vsel %vm288, %v452, %v434
        %v459 = vsel %vm288, %v454, %v435
        %v460 = vsel %vm288, %v456, %v436
        %465 = vrot.lane.b32.xlu0 %v457, 127
        %v466 = vpop.permute.xlu0 %465
        %467 = vrot.lane.b32.xlu0 %v458, 127
        %v468 = vpop.permute.xlu0 %467
        %469 = vrot.lane.b32.xlu0 %v459, 127
        %v470 = vpop.permute.xlu0 %469
        %471 = vrot.lane.b32.xlu0 %v460, 127
        %v472 = vpop.permute.xlu0 %471
        %481 = vrot.lane.b32.xlu0 %v433, 14
        %v482 = vpop.permute.xlu0 %481
        %483 = vrot.lane.b32.xlu0 %v434, 14
        %v484 = vpop.permute.xlu0 %483
        %485 = vrot.lane.b32.xlu0 %v435, 14
        %v486 = vpop.permute.xlu0 %485
        %487 = vrot.lane.b32.xlu0 %v436, 14
        %v488 = vpop.permute.xlu0 %487
        %493 = vrot.lane.b32.xlu0 %v457, 13
        %v494 = vpop.permute.xlu0 %493
        %495 = vrot.lane.b32.xlu0 %v458, 13
        %v496 = vpop.permute.xlu0 %495
        %497 = vrot.lane.b32.xlu0 %v459, 13
        %v498 = vpop.permute.xlu0 %497
        %499 = vrot.lane.b32.xlu0 %v460, 13
        %v500 = vpop.permute.xlu0 %499
        %505 = vrot.lane.b32.xlu0 %v457, 12
        %v506 = vpop.permute.xlu0 %505
        %507 = vrot.lane.b32.xlu0 %v458, 12
        %v508 = vpop.permute.xlu0 %507
        %509 = vrot.lane.b32.xlu0 %v459, 12
        %v510 = vpop.permute.xlu0 %509
        %511 = vrot.lane.b32.xlu0 %v460, 12
        %v512 = vpop.permute.xlu0 %511
        %517 = vrot.lane.b32.xlu0 %v255, 14
        %v518 = vpop.permute.xlu0 %517
        %519 = vrot.lane.b32.xlu0 %v261, 14
        %v520 = vpop.permute.xlu0 %519
        %521 = vrot.lane.b32.xlu0 %v266, 14
        %v522 = vpop.permute.xlu0 %521
        %523 = vrot.lane.b32.xlu0 %v272, 14
        %v524 = vpop.permute.xlu0 %523
        %v529 = vmul.f32 %v457, %v518
        %v530 = vmul.f32 %v458, %v518
        %v531 = vmul.f32 %v459, %v518
        %v532 = vmul.f32 %v460, %v518
        %v533 = vmul.f32 %v466, %v520
        %v534 = vmul.f32 %v468, %v520
        %v535 = vmul.f32 %v470, %v520
        %v536 = vmul.f32 %v472, %v520
        %v537 = vmul.f32 %v482, %v522
        %v538 = vmul.f32 %v484, %v522
        %v539 = vmul.f32 %v486, %v522
        %v540 = vmul.f32 %v488, %v522
        %v541 = vmul.f32 %v494, %v524
        %v542 = vmul.f32 %v496, %v524
        %v543 = vmul.f32 %v498, %v524
        %v544 = vmul.f32 %v500, %v524
        %v545 = vmul.f32 %v506, %v319
        %v546 = vmul.f32 %v508, %v319
        %v547 = vmul.f32 %v510, %v319
        %v548 = vmul.f32 %v512, %v319
        %v549 = vpack.c.bf16 %v530, %v529
        %v550 = vpack.c.bf16 %v532, %v531
        %v551 = vpack.c.bf16 %v534, %v533
        %v552 = vpack.c.bf16 %v536, %v535
        %v553 = vpack.c.bf16 %v538, %v537
        %v554 = vpack.c.bf16 %v540, %v539
        %v555 = vpack.c.bf16 %v542, %v541
        %v556 = vpack.c.bf16 %v544, %v543
        %v557 = vpack.c.bf16 %v546, %v545
        %v558 = vpack.c.bf16 %v548, %v547
        %v559 = vld [vmem:[%s2] sm:$0xff]
        %v560 = vld [vmem:[%s2 + $0x8] sm:$0xff]
        %v561 = vld [vmem:[%s2 + $0x10] sm:$0xff]
        %v562 = vld [vmem:[%s2 + $0x18] sm:$0xff]
        %s563 = scalar_lea.vmem %s3, 32
        %v564 = vld [vmem:[%s563] sm:$0xff]
        %v565 = vld [vmem:[%s563 + $0x8] sm:$0xff]
        %v566 = vld [vmem:[%s563 + $0x10] sm:$0xff]
        %v567 = vld [vmem:[%s563 + $0x18] sm:$0xff]
        %569 = vset.pattern.permute.xlu0 0
        %570 = vperm.xlu0 %569, %v564
        %v571 = vpop.permute.xlu0 %570
        %574 = vset.pattern.permute.xlu0 0
        %575 = vperm.xlu0 %574, %v565
        %v576 = vpop.permute.xlu0 %575
        %579 = vset.pattern.permute.xlu0 0
        %580 = vperm.xlu0 %579, %v566
        %v581 = vpop.permute.xlu0 %580
        %584 = vset.pattern.permute.xlu0 0
        %585 = vperm.xlu0 %584, %v567
        %v586 = vpop.permute.xlu0 %585
        %v592 = vunpack.c.l.b16 %v559
        %v593 = vunpack.c.h.b16 %v559
        %v594 = vunpack.c.l.b16 %v560
        %v595 = vunpack.c.h.b16 %v560
        %v596 = vunpack.c.l.b16 %v561
        %v597 = vunpack.c.h.b16 %v561
        %v598 = vunpack.c.l.b16 %v562
        %v599 = vunpack.c.h.b16 %v562
        %v600 = vpack.c.b16 %v594, %v592
        %v601 = vpack.c.b16 %v595, %v593
        %v602 = vpack.c.b16 %v598, %v596
        %v603 = vpack.c.b16 %v599, %v597
        %616 = vrot.lane.b32.xlu0 %v549, 114
        %v617 = vpop.permute.xlu0 %616
        %618 = vrot.lane.b32.xlu0 %v550, 114
        %v619 = vpop.permute.xlu0 %618
        %620 = vrot.lane.b32.xlu0 %v551, 114
        %v621 = vpop.permute.xlu0 %620
        %622 = vrot.lane.b32.xlu0 %v552, 114
        %v623 = vpop.permute.xlu0 %622
        %624 = vrot.lane.b32.xlu0 %v553, 114
        %v625 = vpop.permute.xlu0 %624
        %626 = vrot.lane.b32.xlu0 %v554, 114
        %v627 = vpop.permute.xlu0 %626
        %628 = vrot.lane.b32.xlu0 %v555, 114
        %v629 = vpop.permute.xlu0 %628
        %630 = vrot.lane.b32.xlu0 %v556, 114
        %v631 = vpop.permute.xlu0 %630
        %632 = vrot.lane.b32.xlu0 %v557, 114
        %v633 = vpop.permute.xlu0 %632
        %634 = vrot.lane.b32.xlu0 %v558, 114
        %v635 = vpop.permute.xlu0 %634
        %vm646 = vcmask 261120
        %v648 = vsel %vm646, %v601, 0
        %v651 = vsel %vm646, %v603, 0
        %653 = vmatprep.subr.bf16.mxu0 0
        %654 = vmatpush1.bf16.msra.mxu0 %v631
        %655 = vmatprep.subr.bf16.mxu0 0
        %656 = vmatpush1.bf16.msra.mxu0 %v629
        %657 = vmatprep.subr.bf16.mxu0 0
        %658 = vmatpush1.bf16.msra.mxu0 %v627
        %659 = vmatprep.subr.bf16.mxu0 0
        %660 = vmatpush1.bf16.msra.mxu0 %v625
        %661 = vmatprep.subr.bf16.mxu0 0
        %662 = vmatpush1.bf16.msra.mxu0 %v623
        %663 = vmatprep.subr.bf16.mxu0 0
        %664 = vmatpush1.bf16.msra.mxu0 %v621
        %665 = vmatprep.subr.bf16.mxu0 0
        %666 = vmatpush1.bf16.msra.mxu0 %v619
        %667 = vmatprep.subr.bf16.mxu0 0
        %668 = vmatpush1.bf16.msra.mxu0 %v617
        %669 = vmatprep.subr.bf16.mxu0 0
        %670 = vmatpush2.bf16.msra.mxu0 0
        %671 = vmatprep.subr.bf16.mxu0 0
        %672 = vmatpush2.bf16.msra.mxu0 0
        %673 = vmatprep.subr.bf16.mxu0 0
        %674 = vmatpush2.bf16.msra.mxu0 0
        %675 = vmatprep.subr.bf16.mxu0 0
        %676 = vmatpush2.bf16.msra.mxu0 0
        %677 = vmatprep.subr.bf16.mxu0 0
        %678 = vmatpush2.bf16.msra.mxu0 0
        %679 = vmatprep.subr.bf16.mxu0 0
        %680 = vmatpush2.bf16.msra.mxu0 0
        %681 = vmatprep.subr.bf16.mxu0 0
        %682 = vmatpush2.bf16.msra.mxu0 %v635
        %683 = vmatprep.subr.bf16.mxu0 0
        %684 = vmatpush2.bf16.msra.mxu0 %v633
        %685 = vmatprep.mubr.bf16.mxu0 %v648
        %686 = vmatmul.mubr.bf16.gmra.mxu0 %v600
        %v687 = vpop.f32.mrf.mxu0
        %v688 = vadd.f32 %v571, %v687
        %v689 = vpop.f32.mrf.mxu0
        %v690 = vpop.f32.mrf.mxu0
        %v691 = vadd.f32 %v576, %v690
        %v692 = vpop.f32.mrf.mxu0
        %693 = vmatprep.mubr.bf16.mxu0 %v651
        %694 = vmatmul.mubr.bf16.gmra.mxu0 %v602
        %v695 = vpop.f32.mrf.mxu0
        %v696 = vadd.f32 %v581, %v695
        %v697 = vpop.f32.mrf.mxu0
        %v698 = vpop.f32.mrf.mxu0
        %v699 = vadd.f32 %v586, %v698
        %v700 = vpop.f32.mrf.mxu0
        %701 = vdwg.mxu0
        %v702 = vmax.f32 %v688, 0.0
        %v703 = vmax.f32 %v691, 0.0
        %v704 = vmax.f32 %v696, 0.0
        %v705 = vmax.f32 %v699, 0.0
        %706 = vrot.lane.b32.xlu0 %v702, 16
        %v707 = vpop.permute.xlu0 %706
        %v708 = vsel %vm288, %v707, %v702
        %709 = vrot.lane.b32.xlu0 %v703, 16
        %v710 = vpop.permute.xlu0 %709
        %v711 = vsel %vm288, %v710, %v703
        %712 = vrot.lane.b32.xlu0 %v704, 16
        %v713 = vpop.permute.xlu0 %712
        %v714 = vsel %vm288, %v713, %v704
        %715 = vrot.lane.b32.xlu0 %v705, 16
        %v716 = vpop.permute.xlu0 %715
        %v717 = vsel %vm288, %v716, %v705
        %718 = vrot.lane.b32.xlu0 %v708, 16
        %v719 = vpop.permute.xlu0 %718
        %720 = vrot.lane.b32.xlu0 %v711, 16
        %v721 = vpop.permute.xlu0 %720
        %722 = vrot.lane.b32.xlu0 %v714, 16
        %v723 = vpop.permute.xlu0 %722
        %724 = vrot.lane.b32.xlu0 %v717, 16
        %v725 = vpop.permute.xlu0 %724
        %v726 = vsel %vm288, %v719, %v702
        %v727 = vsel %vm288, %v721, %v703
        %v728 = vsel %vm288, %v723, %v704
        %v729 = vsel %vm288, %v725, %v705
        %734 = vrot.lane.b32.xlu0 %v726, 127
        %v735 = vpop.permute.xlu0 %734
        %736 = vrot.lane.b32.xlu0 %v727, 127
        %v737 = vpop.permute.xlu0 %736
        %738 = vrot.lane.b32.xlu0 %v728, 127
        %v739 = vpop.permute.xlu0 %738
        %740 = vrot.lane.b32.xlu0 %v729, 127
        %v741 = vpop.permute.xlu0 %740
        %750 = vrot.lane.b32.xlu0 %v702, 14
        %v751 = vpop.permute.xlu0 %750
        %752 = vrot.lane.b32.xlu0 %v703, 14
        %v753 = vpop.permute.xlu0 %752
        %754 = vrot.lane.b32.xlu0 %v704, 14
        %v755 = vpop.permute.xlu0 %754
        %756 = vrot.lane.b32.xlu0 %v705, 14
        %v757 = vpop.permute.xlu0 %756
        %762 = vrot.lane.b32.xlu0 %v726, 13
        %v763 = vpop.permute.xlu0 %762
        %764 = vrot.lane.b32.xlu0 %v727, 13
        %v765 = vpop.permute.xlu0 %764
        %766 = vrot.lane.b32.xlu0 %v728, 13
        %v767 = vpop.permute.xlu0 %766
        %768 = vrot.lane.b32.xlu0 %v729, 13
        %v769 = vpop.permute.xlu0 %768
        %774 = vrot.lane.b32.xlu0 %v726, 12
        %v775 = vpop.permute.xlu0 %774
        %776 = vrot.lane.b32.xlu0 %v727, 12
        %v777 = vpop.permute.xlu0 %776
        %778 = vrot.lane.b32.xlu0 %v728, 12
        %v779 = vpop.permute.xlu0 %778
        %780 = vrot.lane.b32.xlu0 %v729, 12
        %v781 = vpop.permute.xlu0 %780
        %v786 = vmul.f32 %v726, %v518
        %v787 = vmul.f32 %v727, %v518
        %v788 = vmul.f32 %v728, %v518
        %v789 = vmul.f32 %v729, %v518
        %v790 = vmul.f32 %v735, %v520
        %v791 = vmul.f32 %v737, %v520
        %v792 = vmul.f32 %v739, %v520
        %v793 = vmul.f32 %v741, %v520
        %v794 = vmul.f32 %v751, %v522
        %v795 = vmul.f32 %v753, %v522
        %v796 = vmul.f32 %v755, %v522
        %v797 = vmul.f32 %v757, %v522
        %v798 = vmul.f32 %v763, %v524
        %v799 = vmul.f32 %v765, %v524
        %v800 = vmul.f32 %v767, %v524
        %v801 = vmul.f32 %v769, %v524
        %v802 = vmul.f32 %v775, %v319
        %v803 = vmul.f32 %v777, %v319
        %v804 = vmul.f32 %v779, %v319
        %v805 = vmul.f32 %v781, %v319
        %v806 = vpack.c.bf16 %v787, %v786
        %v807 = vpack.c.bf16 %v789, %v788
        %v808 = vpack.c.bf16 %v791, %v790
        %v809 = vpack.c.bf16 %v793, %v792
        %v810 = vpack.c.bf16 %v795, %v794
        %v811 = vpack.c.bf16 %v797, %v796
        %v812 = vpack.c.bf16 %v799, %v798
        %v813 = vpack.c.bf16 %v801, %v800
        %v814 = vpack.c.bf16 %v803, %v802
        %v815 = vpack.c.bf16 %v805, %v804
        %s816 = scalar_lea.vmem %s2, 32
        %v817 = vld [vmem:[%s816] sm:$0xff]
        %v818 = vld [vmem:[%s816 + $0x8] sm:$0xff]
        %v819 = vld [vmem:[%s816 + $0x10] sm:$0xff]
        %v820 = vld [vmem:[%s816 + $0x18] sm:$0xff]
        %s821 = scalar_lea.vmem %s3, 64
        %v822 = vld [vmem:[%s821] sm:$0xff]
        %v823 = vld [vmem:[%s821 + $0x8] sm:$0xff]
        %v824 = vld [vmem:[%s821 + $0x10] sm:$0xff]
        %v825 = vld [vmem:[%s821 + $0x18] sm:$0xff]
        %827 = vset.pattern.permute.xlu0 0
        %828 = vperm.xlu0 %827, %v822
        %v829 = vpop.permute.xlu0 %828
        %832 = vset.pattern.permute.xlu0 0
        %833 = vperm.xlu0 %832, %v823
        %v834 = vpop.permute.xlu0 %833
        %837 = vset.pattern.permute.xlu0 0
        %838 = vperm.xlu0 %837, %v824
        %v839 = vpop.permute.xlu0 %838
        %842 = vset.pattern.permute.xlu0 0
        %843 = vperm.xlu0 %842, %v825
        %v844 = vpop.permute.xlu0 %843
        %v850 = vunpack.c.l.b16 %v817
        %v851 = vunpack.c.h.b16 %v817
        %v852 = vunpack.c.l.b16 %v818
        %v853 = vunpack.c.h.b16 %v818
        %v854 = vunpack.c.l.b16 %v819
        %v855 = vunpack.c.h.b16 %v819
        %v856 = vunpack.c.l.b16 %v820
        %v857 = vunpack.c.h.b16 %v820
        %v858 = vpack.c.b16 %v852, %v850
        %v859 = vpack.c.b16 %v853, %v851
        %v860 = vpack.c.b16 %v856, %v854
        %v861 = vpack.c.b16 %v857, %v855
        %874 = vrot.lane.b32.xlu0 %v806, 114
        %v875 = vpop.permute.xlu0 %874
        %876 = vrot.lane.b32.xlu0 %v807, 114
        %v877 = vpop.permute.xlu0 %876
        %878 = vrot.lane.b32.xlu0 %v808, 114
        %v879 = vpop.permute.xlu0 %878
        %880 = vrot.lane.b32.xlu0 %v809, 114
        %v881 = vpop.permute.xlu0 %880
        %882 = vrot.lane.b32.xlu0 %v810, 114
        %v883 = vpop.permute.xlu0 %882
        %884 = vrot.lane.b32.xlu0 %v811, 114
        %v885 = vpop.permute.xlu0 %884
        %886 = vrot.lane.b32.xlu0 %v812, 114
        %v887 = vpop.permute.xlu0 %886
        %888 = vrot.lane.b32.xlu0 %v813, 114
        %v889 = vpop.permute.xlu0 %888
        %890 = vrot.lane.b32.xlu0 %v814, 114
        %v891 = vpop.permute.xlu0 %890
        %892 = vrot.lane.b32.xlu0 %v815, 114
        %v893 = vpop.permute.xlu0 %892
        %v905 = vsel %vm646, %v859, 0
        %v908 = vsel %vm646, %v861, 0
        %910 = vmatprep.subr.bf16.mxu0 0
        %911 = vmatpush1.bf16.msra.mxu0 %v889
        %912 = vmatprep.subr.bf16.mxu0 0
        %913 = vmatpush1.bf16.msra.mxu0 %v887
        %914 = vmatprep.subr.bf16.mxu0 0
        %915 = vmatpush1.bf16.msra.mxu0 %v885
        %916 = vmatprep.subr.bf16.mxu0 0
        %917 = vmatpush1.bf16.msra.mxu0 %v883
        %918 = vmatprep.subr.bf16.mxu0 0
        %919 = vmatpush1.bf16.msra.mxu0 %v881
        %920 = vmatprep.subr.bf16.mxu0 0
        %921 = vmatpush1.bf16.msra.mxu0 %v879
        %922 = vmatprep.subr.bf16.mxu0 0
        %923 = vmatpush1.bf16.msra.mxu0 %v877
        %924 = vmatprep.subr.bf16.mxu0 0
        %925 = vmatpush1.bf16.msra.mxu0 %v875
        %926 = vmatprep.subr.bf16.mxu0 0
        %927 = vmatpush2.bf16.msra.mxu0 0
        %928 = vmatprep.subr.bf16.mxu0 0
        %929 = vmatpush2.bf16.msra.mxu0 0
        %930 = vmatprep.subr.bf16.mxu0 0
        %931 = vmatpush2.bf16.msra.mxu0 0
        %932 = vmatprep.subr.bf16.mxu0 0
        %933 = vmatpush2.bf16.msra.mxu0 0
        %934 = vmatprep.subr.bf16.mxu0 0
        %935 = vmatpush2.bf16.msra.mxu0 0
        %936 = vmatprep.subr.bf16.mxu0 0
        %937 = vmatpush2.bf16.msra.mxu0 0
        %938 = vmatprep.subr.bf16.mxu0 0
        %939 = vmatpush2.bf16.msra.mxu0 %v893
        %940 = vmatprep.subr.bf16.mxu0 0
        %941 = vmatpush2.bf16.msra.mxu0 %v891
        %942 = vmatprep.mubr.bf16.mxu0 %v905
        %943 = vmatmul.mubr.bf16.gmra.mxu0 %v858
        %v944 = vpop.f32.mrf.mxu0
        %v945 = vadd.f32 %v829, %v944
        %v946 = vpop.f32.mrf.mxu0
        %v947 = vpop.f32.mrf.mxu0
        %v948 = vadd.f32 %v834, %v947
        %v949 = vpop.f32.mrf.mxu0
        %950 = vmatprep.mubr.bf16.mxu0 %v908
        %951 = vmatmul.mubr.bf16.gmra.mxu0 %v860
        %v952 = vpop.f32.mrf.mxu0
        %v953 = vadd.f32 %v839, %v952
        %v954 = vpop.f32.mrf.mxu0
        %v955 = vpop.f32.mrf.mxu0
        %v956 = vadd.f32 %v844, %v955
        %v957 = vpop.f32.mrf.mxu0
        %958 = vdwg.mxu0
        %v959 = vmax.f32 %v945, 0.0
        %v960 = vmax.f32 %v948, 0.0
        %v961 = vmax.f32 %v953, 0.0
        %v962 = vmax.f32 %v956, 0.0
        %963 = vrot.lane.b32.xlu0 %v959, 16
        %v964 = vpop.permute.xlu0 %963
        %v965 = vsel %vm288, %v964, %v959
        %966 = vrot.lane.b32.xlu0 %v960, 16
        %v967 = vpop.permute.xlu0 %966
        %v968 = vsel %vm288, %v967, %v960
        %969 = vrot.lane.b32.xlu0 %v961, 16
        %v970 = vpop.permute.xlu0 %969
        %v971 = vsel %vm288, %v970, %v961
        %972 = vrot.lane.b32.xlu0 %v962, 16
        %v973 = vpop.permute.xlu0 %972
        %v974 = vsel %vm288, %v973, %v962
        %975 = vrot.lane.b32.xlu0 %v965, 16
        %v976 = vpop.permute.xlu0 %975
        %977 = vrot.lane.b32.xlu0 %v968, 16
        %v978 = vpop.permute.xlu0 %977
        %979 = vrot.lane.b32.xlu0 %v971, 16
        %v980 = vpop.permute.xlu0 %979
        %981 = vrot.lane.b32.xlu0 %v974, 16
        %v982 = vpop.permute.xlu0 %981
        %v983 = vsel %vm288, %v976, %v959
        %v984 = vsel %vm288, %v978, %v960
        %v985 = vsel %vm288, %v980, %v961
        %v986 = vsel %vm288, %v982, %v962
        %991 = vrot.lane.b32.xlu0 %v983, 127
        %v992 = vpop.permute.xlu0 %991
        %993 = vrot.lane.b32.xlu0 %v984, 127
        %v994 = vpop.permute.xlu0 %993
        %995 = vrot.lane.b32.xlu0 %v985, 127
        %v996 = vpop.permute.xlu0 %995
        %997 = vrot.lane.b32.xlu0 %v986, 127
        %v998 = vpop.permute.xlu0 %997
        %1007 = vrot.lane.b32.xlu0 %v959, 14
        %v1008 = vpop.permute.xlu0 %1007
        %1009 = vrot.lane.b32.xlu0 %v960, 14
        %v1010 = vpop.permute.xlu0 %1009
        %1011 = vrot.lane.b32.xlu0 %v961, 14
        %v1012 = vpop.permute.xlu0 %1011
        %1013 = vrot.lane.b32.xlu0 %v962, 14
        %v1014 = vpop.permute.xlu0 %1013
        %1019 = vrot.lane.b32.xlu0 %v983, 13
        %v1020 = vpop.permute.xlu0 %1019
        %1021 = vrot.lane.b32.xlu0 %v984, 13
        %v1022 = vpop.permute.xlu0 %1021
        %1023 = vrot.lane.b32.xlu0 %v985, 13
        %v1024 = vpop.permute.xlu0 %1023
        %1025 = vrot.lane.b32.xlu0 %v986, 13
        %v1026 = vpop.permute.xlu0 %1025
        %1031 = vrot.lane.b32.xlu0 %v983, 12
        %v1032 = vpop.permute.xlu0 %1031
        %1033 = vrot.lane.b32.xlu0 %v984, 12
        %v1034 = vpop.permute.xlu0 %1033
        %1035 = vrot.lane.b32.xlu0 %v985, 12
        %v1036 = vpop.permute.xlu0 %1035
        %1037 = vrot.lane.b32.xlu0 %v986, 12
        %v1038 = vpop.permute.xlu0 %1037
        %v1043 = vmul.f32 %v983, %v518
        %v1044 = vmul.f32 %v984, %v518
        %v1045 = vmul.f32 %v985, %v518
        %v1046 = vmul.f32 %v986, %v518
        %v1047 = vmul.f32 %v992, %v520
        %v1048 = vmul.f32 %v994, %v520
        %v1049 = vmul.f32 %v996, %v520
        %v1050 = vmul.f32 %v998, %v520
        %v1051 = vmul.f32 %v1008, %v522
        %v1052 = vmul.f32 %v1010, %v522
        %v1053 = vmul.f32 %v1012, %v522
        %v1054 = vmul.f32 %v1014, %v522
        %v1055 = vmul.f32 %v1020, %v524
        %v1056 = vmul.f32 %v1022, %v524
        %v1057 = vmul.f32 %v1024, %v524
        %v1058 = vmul.f32 %v1026, %v524
        %v1059 = vmul.f32 %v1032, %v319
        %v1060 = vmul.f32 %v1034, %v319
        %v1061 = vmul.f32 %v1036, %v319
        %v1062 = vmul.f32 %v1038, %v319
        %v1063 = vpack.c.bf16 %v1044, %v1043
        %v1064 = vpack.c.bf16 %v1046, %v1045
        %v1065 = vpack.c.bf16 %v1048, %v1047
        %v1066 = vpack.c.bf16 %v1050, %v1049
        %v1067 = vpack.c.bf16 %v1052, %v1051
        %v1068 = vpack.c.bf16 %v1054, %v1053
        %v1069 = vpack.c.bf16 %v1056, %v1055
        %v1070 = vpack.c.bf16 %v1058, %v1057
        %v1071 = vpack.c.bf16 %v1060, %v1059
        %v1072 = vpack.c.bf16 %v1062, %v1061
        %s1073 = scalar_lea.vmem %s2, 64
        %v1074 = vld [vmem:[%s1073] sm:$0xff]
        %v1075 = vld [vmem:[%s1073 + $0x8] sm:$0xff]
        %v1076 = vld [vmem:[%s1073 + $0x10] sm:$0xff]
        %v1077 = vld [vmem:[%s1073 + $0x18] sm:$0xff]
        %s1078 = scalar_lea.vmem %s3, 96
        %v1079 = vld [vmem:[%s1078] sm:$0xff]
        %v1080 = vld [vmem:[%s1078 + $0x8] sm:$0xff]
        %v1081 = vld [vmem:[%s1078 + $0x10] sm:$0xff]
        %v1082 = vld [vmem:[%s1078 + $0x18] sm:$0xff]
        %1084 = vset.pattern.permute.xlu0 0
        %1085 = vperm.xlu0 %1084, %v1079
        %v1086 = vpop.permute.xlu0 %1085
        %1089 = vset.pattern.permute.xlu0 0
        %1090 = vperm.xlu0 %1089, %v1080
        %v1091 = vpop.permute.xlu0 %1090
        %1094 = vset.pattern.permute.xlu0 0
        %1095 = vperm.xlu0 %1094, %v1081
        %v1096 = vpop.permute.xlu0 %1095
        %1099 = vset.pattern.permute.xlu0 0
        %1100 = vperm.xlu0 %1099, %v1082
        %v1101 = vpop.permute.xlu0 %1100
        %v1107 = vunpack.c.l.b16 %v1074
        %v1108 = vunpack.c.h.b16 %v1074
        %v1109 = vunpack.c.l.b16 %v1075
        %v1110 = vunpack.c.h.b16 %v1075
        %v1111 = vunpack.c.l.b16 %v1076
        %v1112 = vunpack.c.h.b16 %v1076
        %v1113 = vunpack.c.l.b16 %v1077
        %v1114 = vunpack.c.h.b16 %v1077
        %v1115 = vpack.c.b16 %v1109, %v1107
        %v1116 = vpack.c.b16 %v1110, %v1108
        %v1117 = vpack.c.b16 %v1113, %v1111
        %v1118 = vpack.c.b16 %v1114, %v1112
        %1131 = vrot.lane.b32.xlu0 %v1063, 114
        %v1132 = vpop.permute.xlu0 %1131
        %1133 = vrot.lane.b32.xlu0 %v1064, 114
        %v1134 = vpop.permute.xlu0 %1133
        %1135 = vrot.lane.b32.xlu0 %v1065, 114
        %v1136 = vpop.permute.xlu0 %1135
        %1137 = vrot.lane.b32.xlu0 %v1066, 114
        %v1138 = vpop.permute.xlu0 %1137
        %1139 = vrot.lane.b32.xlu0 %v1067, 114
        %v1140 = vpop.permute.xlu0 %1139
        %1141 = vrot.lane.b32.xlu0 %v1068, 114
        %v1142 = vpop.permute.xlu0 %1141
        %1143 = vrot.lane.b32.xlu0 %v1069, 114
        %v1144 = vpop.permute.xlu0 %1143
        %1145 = vrot.lane.b32.xlu0 %v1070, 114
        %v1146 = vpop.permute.xlu0 %1145
        %1147 = vrot.lane.b32.xlu0 %v1071, 114
        %v1148 = vpop.permute.xlu0 %1147
        %1149 = vrot.lane.b32.xlu0 %v1072, 114
        %v1150 = vpop.permute.xlu0 %1149
        %v1162 = vsel %vm646, %v1116, 0
        %v1165 = vsel %vm646, %v1118, 0
        %1167 = vmatprep.subr.bf16.mxu0 0
        %1168 = vmatpush1.bf16.msra.mxu0 %v1146
        %1169 = vmatprep.subr.bf16.mxu0 0
        %1170 = vmatpush1.bf16.msra.mxu0 %v1144
        %1171 = vmatprep.subr.bf16.mxu0 0
        %1172 = vmatpush1.bf16.msra.mxu0 %v1142
        %1173 = vmatprep.subr.bf16.mxu0 0
        %1174 = vmatpush1.bf16.msra.mxu0 %v1140
        %1175 = vmatprep.subr.bf16.mxu0 0
        %1176 = vmatpush1.bf16.msra.mxu0 %v1138
        %1177 = vmatprep.subr.bf16.mxu0 0
        %1178 = vmatpush1.bf16.msra.mxu0 %v1136
        %1179 = vmatprep.subr.bf16.mxu0 0
        %1180 = vmatpush1.bf16.msra.mxu0 %v1134
        %1181 = vmatprep.subr.bf16.mxu0 0
        %1182 = vmatpush1.bf16.msra.mxu0 %v1132
        %1183 = vmatprep.subr.bf16.mxu0 0
        %1184 = vmatpush2.bf16.msra.mxu0 0
        %1185 = vmatprep.subr.bf16.mxu0 0
        %1186 = vmatpush2.bf16.msra.mxu0 0
        %1187 = vmatprep.subr.bf16.mxu0 0
        %1188 = vmatpush2.bf16.msra.mxu0 0
        %1189 = vmatprep.subr.bf16.mxu0 0
        %1190 = vmatpush2.bf16.msra.mxu0 0
        %1191 = vmatprep.subr.bf16.mxu0 0
        %1192 = vmatpush2.bf16.msra.mxu0 0
        %1193 = vmatprep.subr.bf16.mxu0 0
        %1194 = vmatpush2.bf16.msra.mxu0 0
        %1195 = vmatprep.subr.bf16.mxu0 0
        %1196 = vmatpush2.bf16.msra.mxu0 %v1150
        %1197 = vmatprep.subr.bf16.mxu0 0
        %1198 = vmatpush2.bf16.msra.mxu0 %v1148
        %1199 = vmatprep.mubr.bf16.mxu0 %v1162
        %1200 = vmatmul.mubr.bf16.gmra.mxu0 %v1115
        %v1201 = vpop.f32.mrf.mxu0
        %v1202 = vadd.f32 %v1086, %v1201
        %v1203 = vpop.f32.mrf.mxu0
        %v1204 = vpop.f32.mrf.mxu0
        %v1205 = vadd.f32 %v1091, %v1204
        %v1206 = vpop.f32.mrf.mxu0
        %1207 = vmatprep.mubr.bf16.mxu0 %v1165
        %1208 = vmatmul.mubr.bf16.gmra.mxu0 %v1117
        %v1209 = vpop.f32.mrf.mxu0
        %v1210 = vadd.f32 %v1096, %v1209
        %v1211 = vpop.f32.mrf.mxu0
        %v1212 = vpop.f32.mrf.mxu0
        %v1213 = vadd.f32 %v1101, %v1212
        %v1214 = vpop.f32.mrf.mxu0
        %1215 = vdwg.mxu0
        %v1216 = vmax.f32 %v1202, 0.0
        %v1217 = vmax.f32 %v1205, 0.0
        %v1218 = vmax.f32 %v1210, 0.0
        %v1219 = vmax.f32 %v1213, 0.0
        %v1220 = vld [vmem:[%s4] sm:$0x3]
        %v1221 = vpack.c.bf16 %v1217, %v1216
        %v1222 = vpack.c.bf16 %v1219, %v1218
        %v1223 = vld [vmem:[%s5] sm:$0xf]
        %1225 = vset.pattern.permute.xlu0 0
        %1226 = vperm.xlu0 %1225, %v1223
        %v1227 = vpop.permute.xlu0 %1226
        %v1230 = vsel %vm646, %v1220, 0
        %1232 = vmatprep.subr.bf16.mxu0 0
        %1233 = vmatpush1.bf16.msra.mxu0 0
        %1234 = vmatprep.subr.bf16.mxu0 0
        %1235 = vmatpush1.bf16.msra.mxu0 0
        %1236 = vmatprep.subr.bf16.mxu0 0
        %1237 = vmatpush1.bf16.msra.mxu0 0
        %1238 = vmatprep.subr.bf16.mxu0 0
        %1239 = vmatpush1.bf16.msra.mxu0 0
        %1240 = vmatprep.subr.bf16.mxu0 0
        %1241 = vmatpush1.bf16.msra.mxu0 0
        %1242 = vmatprep.subr.bf16.mxu0 0
        %1243 = vmatpush1.bf16.msra.mxu0 0
        %1244 = vmatprep.subr.bf16.mxu0 0
        %1245 = vmatpush1.bf16.msra.mxu0 %v1222
        %1246 = vmatprep.subr.bf16.mxu0 0
        %1247 = vmatpush1.bf16.msra.mxu0 %v1221
        %1248 = vmatprep.subr.bf16.mxu0 0
        %1249 = vmatpush2.bf16.msra.mxu0 0
        %1250 = vmatprep.subr.bf16.mxu0 0
        %1251 = vmatpush2.bf16.msra.mxu0 0
        %1252 = vmatprep.subr.bf16.mxu0 0
        %1253 = vmatpush2.bf16.msra.mxu0 0
        %1254 = vmatprep.subr.bf16.mxu0 0
        %1255 = vmatpush2.bf16.msra.mxu0 0
        %1256 = vmatprep.subr.bf16.mxu0 0
        %1257 = vmatpush2.bf16.msra.mxu0 0
        %1258 = vmatprep.subr.bf16.mxu0 0
        %1259 = vmatpush2.bf16.msra.mxu0 0
        %1260 = vmatprep.subr.bf16.mxu0 0
        %1261 = vmatpush2.bf16.msra.mxu0 0
        %1262 = vmatprep.subr.bf16.mxu0 0
        %1263 = vmatpush2.bf16.msra.mxu0 0
        %1264 = vmatprep.mubr.bf16.mxu0 0
        %1265 = vmatmul.mubr.bf16.gmra.mxu0 %v1230
        %v1266 = vpop.f32.mrf.mxu0
        %v1267 = vadd.f32 %v1227, %v1266
        %v1268 = vpop.f32.mrf.mxu0
        %v1269 = vpop.f32.mrf.mxu0
        %v1270 = vpop.f32.mrf.mxu0
        %1271 = vdwg.mxu0
        %vm1272 = vcmask 125952
        %1273 = vst.msk [vmem:[%s242] sm:$0xf] %vm1272, %v1267
        %s1274 = sand.u32 %s159, 1
        %s1275 = scalar_lea.sflag [#allocation3], %s1274
        %s1276 = sand.u32 %s159, 1
        %s1277 = smul.addr %s1276, 4
        %s1278 = scalar_lea.vmem [#allocation2], %s1277
        // Predicated region
        $region45: #{tpu_custom_call.1} parent=43 // pred_check
          %p1279 = pneg %p169
        $region46: #{tpu_custom_call.1} parent=43 // pred_check_branch
          %1281 = sbr.rel (%p1279) target = $region48
        $region47: #{tpu_custom_call.1} parent=43 // pred_region
          %s1283 = ssub.s32 64, 64
          %1284 = vsyncadd %s1275, %s1283
          %s1285 = smul.addr %s20, 64
          %s1286 = scalar_lea.hbm %s6, %s1285
          %s1288 = sshll.u32 %s1278, 4
          %s1289 = int_to_ptr.vmem [resolvable:$true] %s1288
          %1291 = dma.vmem_to_hbm [thread:$0]  %s1289, 64, %s1286, %s1275
        $region48: #{tpu_custom_call.1} parent=43 // pred_fallthru
          _
      $region44: #{tpu_custom_call.1} parent=5 // pred_fallthru
        _
      %p1292 = scmp.le.s32.totalorder 2, %s15
      // Predicated region
      $region49: #{tpu_custom_call.1} parent=5 // pred_check
        %p1293 = pneg %p1292
      $region50: #{tpu_custom_call.1} parent=5 // pred_check_branch
        %1295 = sbr.rel (%p1293) target = $region52
      $region51: #{tpu_custom_call.1} parent=5 // pred_region
        %s1296 = ssub.s32 %s15, 2
        // Predicated region
        $region53: #{tpu_custom_call.1} parent=51 // pred_check
          %p1297 = pneg %p175
        $region54: #{tpu_custom_call.1} parent=51 // pred_check_branch
          %1299 = sbr.rel (%p1297) target = $region56
        $region55: #{tpu_custom_call.1} parent=51 // pred_region
          %s1300 = sand.u32 %s160, 1
          %s1301 = scalar_lea.sflag [#allocation3], %s1300
          %s1302 = sand.u32 %s160, 1
          %s1303 = smul.addr %s1302, 4
          %s1304 = scalar_lea.vmem [#allocation2], %s1303
          %1305 = dma.done %s1301, 64
        $region56: #{tpu_custom_call.1} parent=51 // pred_fallthru
          _
      $region52: #{tpu_custom_call.1} parent=5 // pred_fallthru
        _
    $region6: #{tpu_custom_call.1} parent=1 // loop_footer
      %s19 = sadd.s32 1, %s15
    $region7: #{tpu_custom_call.1} parent=1 // loop_footer_branch
      %14 = sbr.rel target = $region3
    $region8: #{tpu_custom_call.1} parent=1 // loop_exit
      _
    %1306 = vsyncpa [#allocation3], 1
    %s1307 = scalar_lea.sflag [#allocation3], 1
    %1308 = vsyncpa %s1307, 1

</llo_original>
